<compile_context>
chip_gen: v5e
topology: v5e:2x2
jax: 0.10.0
libtpu: 0.0.40
codegen_flags: <defaults>
</compile_context>

<pallas_src>
import jax
import jax.numpy as jnp
from jax.experimental import pallas as pl
from jax.experimental.pallas import tpu as pltpu


def _conv1x1_kernel(x_ref, w_ref, o_ref, acc_ref):
    # x_ref:   (tk, HW)       bf16 K-slice of the image (lane dim = HW)
    # w_ref:   (tile_co, tk)  bf16 K-slice of the weight
    # o_ref:   (tile_co, HW)  output tile, resident across the K grid axis
    # acc_ref: (tile_co, HW)  f32 accumulator scratch
    k = pl.program_id(2)

    @pl.when(k == 0)
    def _():
        acc_ref[...] = jnp.zeros_like(acc_ref)

    acc_ref[...] += jnp.dot(
        w_ref[...], x_ref[...], preferred_element_type=jnp.float32
    )

    @pl.when(k == pl.num_programs(2) - 1)
    def _():
        o_ref[...] = acc_ref[...].astype(o_ref.dtype)


def conv2d_1x1(
    x_nchw: jax.Array,
    weight_oihw: jax.Array,
    *,
    tile_co: int = 256,
    n_k_tiles: int = 2,
) -> jax.Array:
    """1x1 conv, stride 1, no bias. x: (N, C_in, H, W), weight: (C_out, C_in, 1, 1)."""
    n, c_in, h, w = x_nchw.shape
    c_out = weight_oihw.shape[0]
    hw = h * w
    out_dtype = x_nchw.dtype  # keep the module's output dtype (f32)

    # bf16 storage halves HBM traffic on this memory-bound shape; accumulation
    # stays f32 inside the MXU.
    x_rows = x_nchw.reshape(n, c_in, hw).astype(jnp.bfloat16)   # (N, C_in, H*W)
    w_mat = weight_oihw.reshape(c_out, c_in).astype(jnp.bfloat16)  # (C_out, C_in)

    # Fill the 256-wide MXU on v6e/v7x when possible; graceful fallbacks.
    if c_out % tile_co != 0:
        tile_co = 128 if c_out % 128 == 0 else c_out
    n_co_tiles = c_out // tile_co

    # K-split keeps >= 2 pipelined grid steps (DMA/compute overlap) even when
    # n_co_tiles == 1.  K tiles must stay multiples of 128 for the (8,128) rule.
    if n_k_tiles > 1 and c_in % (n_k_tiles * 128) == 0:
        tk = c_in // n_k_tiles
    else:
        n_k_tiles = 1
        tk = c_in

    out_bytes = jnp.dtype(out_dtype).itemsize
    cost = pl.CostEstimate(
        flops=2 * n * c_out * c_in * hw,
        bytes_accessed=(n * c_in * hw + c_out * c_in) * 2  # bf16 inputs
        + n * c_out * hw * out_bytes,
        transcendentals=0,
    )

    out = pl.pallas_call(
        _conv1x1_kernel,
        out_shape=jax.ShapeDtypeStruct((n, c_out, hw), out_dtype),
        grid_spec=pltpu.PrefetchScalarGridSpec(
            num_scalar_prefetch=0,
            grid=(n, n_co_tiles, n_k_tiles),
            in_specs=[
                # x: K-slices stream along the (innermost) reduction axis.
                pl.BlockSpec((pl.Squeezed(), tk, hw), lambda b, j, k: (b, k, 0)),
                # w: (C_out tile, K tile).
                pl.BlockSpec((tile_co, tk), lambda b, j, k: (j, k)),
            ],
            # Constant block index along k -> output tile resident across the
            # reduction; last dim hw equals the full array dim so the (8,128)
            # rule holds even though 196 is not a multiple of 128.
            out_specs=pl.BlockSpec(
                (pl.Squeezed(), tile_co, hw), lambda b, j, k: (b, j, 0)
            ),
            scratch_shapes=[pltpu.VMEM((tile_co, hw), jnp.float32)],
        ),
        compiler_params=pltpu.CompilerParams(
            dimension_semantics=("parallel", "parallel", "arbitrary"),
        ),
        cost_estimate=cost,
    )(x_rows, w_mat)

    # (N, C_out, H*W) -> NCHW, free reshape.
    return out.reshape(n, c_out, h, w)


if __name__ == "__main__":
    key = jax.random.PRNGKey(0)
    k_x, k_w = jax.random.split(key)

    # Shapes implied by the module's forward: x203 is (1, 1280, 14, 14),
    # conv weight is (256, 1280, 1, 1).
    N, C_IN, H, W = 1, 1280, 14, 14
    C_OUT = 256

    x = jax.random.normal(k_x, (N, C_IN, H, W), dtype=jnp.float32)
    # Deterministic synthetic weight (scaled roughly like kaiming-uniform fan_in).
    weight = jax.random.normal(k_w, (C_OUT, C_IN, 1, 1), dtype=jnp.float32) * (
        1.0 / (C_IN**0.5)
    )

    out = conv2d_1x1(x, weight)
    out = jax.block_until_ready(out)
    assert out.shape == (N, C_OUT, H, W), out.shape
    assert out.dtype == jnp.float32, out.dtype

    # Reference: plain JAX einsum on the same bf16-rounded inputs with f32
    # accumulation (isolates the kernel from the intentional bf16 storage cast).
    x_bf = x.astype(jnp.bfloat16).astype(jnp.float32)
    w_bf = weight.reshape(C_OUT, C_IN).astype(jnp.bfloat16).astype(jnp.float32)
    ref = jnp.einsum("nchw,oc->nohw", x_bf.reshape(N, C_IN, H, W), w_bf)
    assert jnp.allclose(out, ref, atol=2e-3, rtol=2e-3), "mismatch vs reference"

    print("KERNEL_OK")
</pallas_src>

<mosaic_0001>
module attributes {stable_mosaic.version = 11 : i64} {
  func.func @_conv1x1_kernel(%arg0: i32, %arg1: i32, %arg2: i32, %arg3: memref<1x640x196xbf16, #tpu.memory_space<vmem>>, %arg4: memref<256x640xbf16, #tpu.memory_space<vmem>>, %arg5: memref<1x256x196xf32, #tpu.memory_space<vmem>>, %arg6: memref<256x196xf32, #tpu.memory_space<vmem>>) attributes {dimension_semantics = [#tpu.dimension_semantics<parallel>, #tpu.dimension_semantics<parallel>, #tpu.dimension_semantics<arbitrary>], iteration_bounds = array<i64: 1, 1, 2>, scalar_prefetch = 0 : i64, scratch_operands = 1 : i64, tpu.core_type = #tpu.core_type<tc>, window_params = [{transform_indices = @transform_0, window_bounds = array<i64: 1, 640, 196>}, {transform_indices = @transform_1, window_bounds = array<i64: 256, 640>}, {transform_indices = @transform_2, window_bounds = array<i64: 1, 256, 196>}]} {
    %c0_i32 = arith.constant 0 : i32
    %0 = arith.cmpi eq, %arg2, %c0_i32 : i32
    %1 = arith.extui %0 : i1 to i32
    %c0_i32_0 = arith.constant 0 : i32
    %2 = arith.cmpi ne, %1, %c0_i32_0 : i32
    scf.if %2 {
      %cst_10 = arith.constant 0.000000e+00 : f32
      %13 = vector.broadcast %cst_10 : f32 to vector<256x196xf32>
      %c0_11 = arith.constant 0 : index
      %c0_12 = arith.constant 0 : index
      %14 = vector.load %arg6[%c0_11, %c0_12] : memref<256x196xf32, #tpu.memory_space<vmem>>, vector<256x196xf32>
      tpu.vector_store %arg6[%c0_11, %c0_12], %13 {strides = array<i32>} : memref<256x196xf32, #tpu.memory_space<vmem>>, vector<256x196xf32>,
    } else {
    }
    %c0 = arith.constant 0 : index
    %c0_1 = arith.constant 0 : index
    %3 = vector.load %arg6[%c0, %c0_1] : memref<256x196xf32, #tpu.memory_space<vmem>>, vector<256x196xf32>
    %c0_2 = arith.constant 0 : index
    %c0_3 = arith.constant 0 : index
    %4 = vector.load %arg4[%c0_2, %c0_3] : memref<256x640xbf16, #tpu.memory_space<vmem>>, vector<256x640xbf16>
    %c0_4 = arith.constant 0 : index
    %c0_5 = arith.constant 0 : index
    %c0_6 = arith.constant 0 : index
    %5 = vector.load %arg3[%c0_4, %c0_5, %c0_6] : memref<1x640x196xbf16, #tpu.memory_space<vmem>>, vector<1x640x196xbf16>
    %6 = vector.shape_cast %5 : vector<1x640x196xbf16> to vector<640x196xbf16>
    %cst = arith.constant dense<0.000000e+00> : vector<256x196xf32>
    %7 = tpu.matmul %4, %6, %cst {dimension_numbers = #tpu.dot_dimension_numbers<[1], [0], [0], [1], [0, 0, 1, 1], [], []>} : vector<256x640xbf16>, vector<640x196xbf16>, vector<256x196xf32> -> vector<256x196xf32>
    %8 = arith.addf %3, %7 : vector<256x196xf32>
    %c0_7 = arith.constant 0 : index
    %c0_8 = arith.constant 0 : index
    %9 = vector.load %arg6[%c0_7, %c0_8] : memref<256x196xf32, #tpu.memory_space<vmem>>, vector<256x196xf32>
    tpu.vector_store %arg6[%c0_7, %c0_8], %8 {strides = array<i32>} : memref<256x196xf32, #tpu.memory_space<vmem>>, vector<256x196xf32>,
    %c1_i32 = arith.constant 1 : i32
    %10 = arith.cmpi eq, %arg2, %c1_i32 : i32
    %11 = arith.extui %10 : i1 to i32
    %c0_i32_9 = arith.constant 0 : i32
    %12 = arith.cmpi ne, %11, %c0_i32_9 : i32
    scf.if %12 {
      %c0_10 = arith.constant 0 : index
      %c0_11 = arith.constant 0 : index
      %13 = vector.load %arg6[%c0_10, %c0_11] : memref<256x196xf32, #tpu.memory_space<vmem>>, vector<256x196xf32>
      %c0_12 = arith.constant 0 : index
      %c0_13 = arith.constant 0 : index
      %c0_14 = arith.constant 0 : index
      %14 = vector.load %arg5[%c0_12, %c0_13, %c0_14] : memref<1x256x196xf32, #tpu.memory_space<vmem>>, vector<1x256x196xf32>
      %15 = vector.shape_cast %14 : vector<1x256x196xf32> to vector<256x196xf32>
      %16 = vector.shape_cast %13 : vector<256x196xf32> to vector<1x256x196xf32>
      tpu.vector_store %arg5[%c0_12, %c0_13, %c0_14], %16 {strides = array<i32>} : memref<1x256x196xf32, #tpu.memory_space<vmem>>, vector<1x256x196xf32>,
    } else {
    }
    return
  }
  func.func @transform_0(%arg0: i32, %arg1: i32, %arg2: i32) -> (i32, i32, i32) {
    %c0_i32 = arith.constant 0 : i32
    %c0_i32_0 = arith.constant 0 : i32
    return %arg0, %arg2, %c0_i32 : i32, i32, i32
  }
  func.func @transform_1(%arg0: i32, %arg1: i32, %arg2: i32) -> (i32, i32) {
    %c0_i32 = arith.constant 0 : i32
    return %arg1, %arg2 : i32, i32
  }
  func.func @transform_2(%arg0: i32, %arg1: i32, %arg2: i32) -> (i32, i32, i32) {
    %c0_i32 = arith.constant 0 : i32
    %c0_i32_0 = arith.constant 0 : i32
    return %arg0, %arg1, %c0_i32 : i32, i32, i32
  }
}

</mosaic_0001>

<llo_original>
// kernel: tpu_custom_call.1
$region0: #{tpu_custom_call.1}
  #allocation0 [shape = 'u32[]', space=smem, size = 0x4, offset = 0x4, fixed_abs, tag = 'smem constant byte address 0x4 - core index']
  #allocation1 [shape = 'u32[72,128]{1,0:T(1,128)}', space=vmem, size = 0x9000, scoped, tag = 'internal scratch']
  #allocation2 [shape = 'f32[256,196]{1,0:T(8,128)}', space=vmem, size = 0x40000, scoped, tag = 'scratch operand']
  %s0 = inlined_call_operand.vmem [shape: bf16[1,1280,196], index: 0, kind: input, shape index: {}]
  %s1 = inlined_call_operand.vmem [shape: bf16[256,1280], index: 1, kind: input, shape index: {}]
  %s2 = inlined_call_operand.vmem [shape: f32[1,256,196], index: 2, kind: output, shape index: {}]
  %s3 = sld [smem:[#allocation0]]
  $region75: #{tpu_custom_call.1} parent=0
    _
  %s5 = ssub.s32 1, %s3
  %s6 = scalar_select 0, %s5, %s3
  $region1: #{tpu_custom_call.1} parent=0
    #allocation3 [shape = 'u8[655360]{0}', space=vmem, size = 0xa0000, scoped, tag = 'input window, operand 1']
    loop: start=0, step=1, limit=4
    $region2: #{tpu_custom_call.1} parent=1 // loop_pre_header
      _
    $region3: #{tpu_custom_call.1} parent=1 // loop_header
      %s8 = sphi 0, %s12
      %p9 = scmp.ge.s32.totalorder %s8, 4
      %s15 = sphi 0, %s34
      %s16 = sphi 0, %s30
      %s17 = sphi 0, %s26
      %s18 = sphi 0, %s15
      %s19 = sphi 0, %s16
      %s20 = sphi 0, %s17
      %s21 = sphi 0, %s18
      %s22 = sphi 0, %s19
      %s23 = sphi 0, %s20
      %s39 = sphi 0, %s41
      %s42 = sphi 0, %s39
      %s43 = sphi 0, %s42
      %s59 = sphi 0, %s43
      %s67 = sphi 0, %s69
      %s70 = sphi 0, %s67
      %s71 = sphi 0, %s70
      %s87 = sphi 0, %s71
      %s95 = sphi 0, %s97
      %s98 = sphi 0, %s95
      %s99 = sphi 0, %s98
      %s115 = sphi 0, %s99
    $region4: #{tpu_custom_call.1} parent=1 // loop_header_branch
      %11 = sbr.rel (%p9) target = $region8
    $region5: #{tpu_custom_call.1} parent=1 // loop_body
      %s13 = ssub.s32 %s8, 1
      %s14 = ssub.s32 %s8, 2
      %s24 = sadd.s32 1, %s17
      %p25 = scmp.ge.s32.totalorder %s24, 2
      %s26 = scalar_select %p25, 0, %s24
      %s27 = sadd.s32 1, %s16
      %s28 = scalar_select %p25, %s27, %s16
      %p29 = scmp.ge.s32.totalorder %s28, 1
      %s30 = scalar_select %p29, 0, %s28
      %s31 = sadd.s32 1, %s15
      %s32 = scalar_select %p29, %s31, %s15
      %p33 = scmp.ge.s32.totalorder %s32, 1
      %s34 = scalar_select %p33, 0, %s32
      %s35 = ssub.s32 %s15, %s34
      %s36 = ssub.s32 %s17, %s26
      %s37 = sor.u32 %s35, %s36
      %p38 = scmp.eq.s32.totalorder %s37, 0
      %s40 = sadd.s32 %s39, 1
      %s41 = scalar_select %p38, %s39, %s40
      %p44 = pneg %p38
      %p45 = scmp.eq.s32.totalorder %s8, 1
      %p46 = por %p44, %p45
      %p47 = scmp.ne.s32.totalorder %s39, %s42
      %p48 = scmp.eq.s32.totalorder %s8, 0
      %p49 = por %p47, %p48
      %p50 = scmp.ne.s32.totalorder %s39, %s42
      %p51 = scmp.eq.s32.totalorder %s13, 1
      %p52 = por %p50, %p51
      %p53 = scmp.ne.s32.totalorder %s42, %s43
      %p54 = scmp.eq.s32.totalorder %s13, 0
      %p55 = por %p53, %p54
      %p56 = scmp.ne.s32.totalorder %s42, %s43
      %p57 = scmp.eq.s32.totalorder %s14, 1
      %p58 = por %p56, %p57
      %p60 = scmp.ne.s32.totalorder %s43, %s59
      %p61 = scmp.eq.s32.totalorder %s14, 0
      %p62 = por %p60, %p61
      %s63 = ssub.s32 %s16, %s30
      %s64 = ssub.s32 %s17, %s26
      %s65 = sor.u32 %s63, %s64
      %p66 = scmp.eq.s32.totalorder %s65, 0
      %s68 = sadd.s32 %s67, 1
      %s69 = scalar_select %p66, %s67, %s68
      %p72 = pneg %p66
      %p73 = scmp.eq.s32.totalorder %s8, 1
      %p74 = por %p72, %p73
      %p75 = scmp.ne.s32.totalorder %s67, %s70
      %p76 = scmp.eq.s32.totalorder %s8, 0
      %p77 = por %p75, %p76
      %p78 = scmp.ne.s32.totalorder %s67, %s70
      %p79 = scmp.eq.s32.totalorder %s13, 1
      %p80 = por %p78, %p79
      %p81 = scmp.ne.s32.totalorder %s70, %s71
      %p82 = scmp.eq.s32.totalorder %s13, 0
      %p83 = por %p81, %p82
      %p84 = scmp.ne.s32.totalorder %s70, %s71
      %p85 = scmp.eq.s32.totalorder %s14, 1
      %p86 = por %p84, %p85
      %p88 = scmp.ne.s32.totalorder %s71, %s87
      %p89 = scmp.eq.s32.totalorder %s14, 0
      %p90 = por %p88, %p89
      %s91 = ssub.s32 %s15, %s34
      %s92 = ssub.s32 %s16, %s30
      %s93 = sor.u32 %s91, %s92
      %p94 = scmp.eq.s32.totalorder %s93, 0
      %s96 = sadd.s32 %s95, 1
      %s97 = scalar_select %p94, %s95, %s96
      %p100 = pneg %p94
      %p101 = scmp.eq.s32.totalorder %s8, 1
      %p102 = por %p100, %p101
      %p103 = scmp.ne.s32.totalorder %s95, %s98
      %p104 = scmp.eq.s32.totalorder %s8, 0
      %p105 = por %p103, %p104
      %p106 = scmp.ne.s32.totalorder %s95, %s98
      %p107 = scmp.eq.s32.totalorder %s13, 1
      %p108 = por %p106, %p107
      %p109 = scmp.ne.s32.totalorder %s98, %s99
      %p110 = scmp.eq.s32.totalorder %s13, 0
      %p111 = por %p109, %p110
      %p112 = scmp.ne.s32.totalorder %s98, %s99
      %p113 = scmp.eq.s32.totalorder %s14, 1
      %p114 = por %p112, %p113
      %p116 = scmp.ne.s32.totalorder %s99, %s115
      %p117 = scmp.eq.s32.totalorder %s14, 0
      %p118 = por %p116, %p117
      %p119 = scmp.le.s32.totalorder 1, %s8
      %p120 = scmp.lt.s32.totalorder %s8, 3
      %p121 = pnand %p119, %p120
      %p122 = pneg %p121
      // Predicated region
      $region9: #{tpu_custom_call.1} parent=5 // pred_check
        _
      $region10: #{tpu_custom_call.1} parent=5 // pred_check_branch
        %124 = sbr.rel (%p121) target = $region12
      $region11: #{tpu_custom_call.1} parent=5 // pred_region
        %s125 = ssub.s32 %s8, 1
      $region12: #{tpu_custom_call.1} parent=5 // pred_fallthru
        _
      %p126 = scmp.lt.s32.totalorder %s8, 2
      // Predicated region
      $region13: #{tpu_custom_call.1} parent=5 // pred_check
        %p127 = pneg %p126
      $region14: #{tpu_custom_call.1} parent=5 // pred_check_branch
        %129 = sbr.rel (%p127) target = $region16
      $region15: #{tpu_custom_call.1} parent=5 // pred_region
        // Predicated region
        $region17: #{tpu_custom_call.1} parent=15 // pred_check
          %p130 = pneg %p49
        $region18: #{tpu_custom_call.1} parent=15 // pred_check_branch
          %132 = sbr.rel (%p130) target = $region20
        $region19: #{tpu_custom_call.1} parent=15 // pred_region
          %s133 = smul.u32 80, %s17
          %p134 = scmp.lt.s32.totalorder %s15, 0
          %s135 = scalar_select %p134, %s15, 0
          %p136 = scmp.lt.s32.totalorder %s133, 159
          %s137 = scalar_select %p136, %s133, 159
          %s138 = smul.addr %s137, 2
          %s139 = smul.addr %s135, 320
          %s140 = sadd.s32 %s138, %s139
          %s141 = smul.addr %s140, 4
          %s142 = scalar_lea.vmem %s0, %s141
          %s143 = smul.u32 80, %s17
        $region20: #{tpu_custom_call.1} parent=15 // pred_fallthru
          _
        // Predicated region
        $region21: #{tpu_custom_call.1} parent=15 // pred_check
          %p144 = pneg %p77
        $region22: #{tpu_custom_call.1} parent=15 // pred_check_branch
          %146 = sbr.rel (%p144) target = $region24
        $region23: #{tpu_custom_call.1} parent=15 // pred_region
          %s147 = sand.u32 %s67, 1
          %s148 = sand.u32 %s67, 1
          %s149 = smul.addr %s148, 640
          %s150 = scalar_lea.vmem [#allocation3], %s149
          %s151 = smul.u32 32, %s16
          %s152 = smul.u32 5, %s17
          %s153 = smul.addr %s151, 10
          %s154 = sadd.s32 %s152, %s153
          %s155 = smul.addr %s154, 4
          %s156 = scalar_lea.vmem %s1, %s155
          // Predicated region
          $region25: #{tpu_custom_call.1} parent=23 // pred_check
            _
          $region26: #{tpu_custom_call.1} parent=23 // pred_check_branch
            %158 = sbr.rel (0) target = $region28
          $region27: #{tpu_custom_call.1} parent=23 // pred_region
            // Predicated region
            $region29: #{tpu_custom_call.1} parent=27 // pred_check
              _
            $region30: #{tpu_custom_call.1} parent=27 // pred_check_branch
              %160 = sbr.rel (0) target = $region32
            $region31: #{tpu_custom_call.1} parent=27 // pred_region
              %s161 = scalar_lea.vmem %s156, 16
              %s162 = scalar_lea.vmem %s150, 16 [#allocation3]
              loop: start=0, step=1, limit=1
              $region33: #{tpu_custom_call.1} parent=31 // loop_pre_header
                _
              $region34: #{tpu_custom_call.1} parent=31 // loop_header
                %s164 = sphi 0, %s168
                %p165 = scmp.ge.s32.totalorder %s164, 1
                %s169 = sphi %s156, %s156
                %s170 = sphi %s150, %s150
              $region35: #{tpu_custom_call.1} parent=31 // loop_header_branch
                %167 = sbr.rel (%p165) target = $region39
              $region36: #{tpu_custom_call.1} parent=31 // loop_body
                %v171 = vld [vmem:[%s169] sm:$0xff]
                %172 = vst [vmem:[%s170] sm:$0xff] %v171
                %v173 = vld [vmem:[%s169 + $0x8] sm:$0xff]
                %174 = vst [vmem:[%s170 + $0x8] sm:$0xff] %v173
                %v175 = vld [vmem:[%s169 + $0x28] sm:$0xff]
                %176 = vst [vmem:[%s170 + $0x14] sm:$0xff] %v175
                %v177 = vld [vmem:[%s169 + $0x30] sm:$0xff]
                %178 = vst [vmem:[%s170 + $0x1c] sm:$0xff] %v177
                %v179 = vld [vmem:[%s169 + $0x50] sm:$0xff]
                %180 = vst [vmem:[%s170 + $0x28] sm:$0xff] %v179
                %v181 = vld [vmem:[%s169 + $0x58] sm:$0xff]
                %182 = vst [vmem:[%s170 + $0x30] sm:$0xff] %v181
                %v183 = vld [vmem:[%s169 + $0x78] sm:$0xff]
                %184 = vst [vmem:[%s170 + $0x3c] sm:$0xff] %v183
                %v185 = vld [vmem:[%s169 + $0x80] sm:$0xff]
                %186 = vst [vmem:[%s170 + $0x44] sm:$0xff] %v185
                %v187 = vld [vmem:[%s169 + $0xa0] sm:$0xff]
                %188 = vst [vmem:[%s170 + $0x50] sm:$0xff] %v187
                %v189 = vld [vmem:[%s169 + $0xa8] sm:$0xff]
                %190 = vst [vmem:[%s170 + $0x58] sm:$0xff] %v189
                %v191 = vld [vmem:[%s169 + $0xc8] sm:$0xff]
                %192 = vst [vmem:[%s170 + $0x64] sm:$0xff] %v191
                %v193 = vld [vmem:[%s169 + $0xd0] sm:$0xff]
                %194 = vst [vmem:[%s170 + $0x6c] sm:$0xff] %v193
                %v195 = vld [vmem:[%s169 + $0xf0] sm:$0xff]
                %196 = vst [vmem:[%s170 + $0x78] sm:$0xff] %v195
                %v197 = vld [vmem:[%s169 + $0xf8] sm:$0xff]
                %198 = vst [vmem:[%s170 + $0x80] sm:$0xff] %v197
                %v199 = vld [vmem:[%s169 + $0x118] sm:$0xff]
                %200 = vst [vmem:[%s170 + $0x8c] sm:$0xff] %v199
                %v201 = vld [vmem:[%s169 + $0x120] sm:$0xff]
                %202 = vst [vmem:[%s170 + $0x94] sm:$0xff] %v201
                %v203 = vld [vmem:[%s169 + $0x140] sm:$0xff]
                %204 = vst [vmem:[%s170 + $0xa0] sm:$0xff] %v203
                %v205 = vld [vmem:[%s169 + $0x148] sm:$0xff]
                %206 = vst [vmem:[%s170 + $0xa8] sm:$0xff] %v205
                %v207 = vld [vmem:[%s169 + $0x168] sm:$0xff]
                %208 = vst [vmem:[%s170 + $0xb4] sm:$0xff] %v207
                %v209 = vld [vmem:[%s169 + $0x170] sm:$0xff]
                %210 = vst [vmem:[%s170 + $0xbc] sm:$0xff] %v209
                %v211 = vld [vmem:[%s169 + $0x190] sm:$0xff]
                %212 = vst [vmem:[%s170 + $0xc8] sm:$0xff] %v211
                %v213 = vld [vmem:[%s169 + $0x198] sm:$0xff]
                %214 = vst [vmem:[%s170 + $0xd0] sm:$0xff] %v213
                %v215 = vld [vmem:[%s169 + $0x1b8] sm:$0xff]
                %216 = vst [vmem:[%s170 + $0xdc] sm:$0xff] %v215
                %v217 = vld [vmem:[%s169 + $0x1c0] sm:$0xff]
                %218 = vst [vmem:[%s170 + $0xe4] sm:$0xff] %v217
                %v219 = vld [vmem:[%s169 + $0x1e0] sm:$0xff]
                %220 = vst [vmem:[%s170 + $0xf0] sm:$0xff] %v219
                %v221 = vld [vmem:[%s169 + $0x1e8] sm:$0xff]
                %222 = vst [vmem:[%s170 + $0xf8] sm:$0xff] %v221
                %v223 = vld [vmem:[%s169 + $0x208] sm:$0xff]
                %224 = vst [vmem:[%s170 + $0x104] sm:$0xff] %v223
                %v225 = vld [vmem:[%s169 + $0x210] sm:$0xff]
                %226 = vst [vmem:[%s170 + $0x10c] sm:$0xff] %v225
                %v227 = vld [vmem:[%s169 + $0x230] sm:$0xff]
                %228 = vst [vmem:[%s170 + $0x118] sm:$0xff] %v227
                %v229 = vld [vmem:[%s169 + $0x238] sm:$0xff]
                %230 = vst [vmem:[%s170 + $0x120] sm:$0xff] %v229
                %v231 = vld [vmem:[%s169 + $0x258] sm:$0xff]
                %232 = vst [vmem:[%s170 + $0x12c] sm:$0xff] %v231
                %v233 = vld [vmem:[%s169 + $0x260] sm:$0xff]
                %234 = vst [vmem:[%s170 + $0x134] sm:$0xff] %v233
                %v235 = vld [vmem:[%s169 + $0x280] sm:$0xff]
                %236 = vst [vmem:[%s170 + $0x140] sm:$0xff] %v235
                %v237 = vld [vmem:[%s169 + $0x288] sm:$0xff]
                %238 = vst [vmem:[%s170 + $0x148] sm:$0xff] %v237
                %v239 = vld [vmem:[%s169 + $0x2a8] sm:$0xff]
                %240 = vst [vmem:[%s170 + $0x154] sm:$0xff] %v239
                %v241 = vld [vmem:[%s169 + $0x2b0] sm:$0xff]
                %242 = vst [vmem:[%s170 + $0x15c] sm:$0xff] %v241
                %v243 = vld [vmem:[%s169 + $0x2d0] sm:$0xff]
                %244 = vst [vmem:[%s170 + $0x168] sm:$0xff] %v243
                %v245 = vld [vmem:[%s169 + $0x2d8] sm:$0xff]
                %246 = vst [vmem:[%s170 + $0x170] sm:$0xff] %v245
                %v247 = vld [vmem:[%s169 + $0x2f8] sm:$0xff]
                %248 = vst [vmem:[%s170 + $0x17c] sm:$0xff] %v247
                %v249 = vld [vmem:[%s169 + $0x300] sm:$0xff]
                %250 = vst [vmem:[%s170 + $0x184] sm:$0xff] %v249
                %v251 = vld [vmem:[%s169 + $0x320] sm:$0xff]
                %252 = vst [vmem:[%s170 + $0x190] sm:$0xff] %v251
                %v253 = vld [vmem:[%s169 + $0x328] sm:$0xff]
                %254 = vst [vmem:[%s170 + $0x198] sm:$0xff] %v253
                %v255 = vld [vmem:[%s169 + $0x348] sm:$0xff]
                %256 = vst [vmem:[%s170 + $0x1a4] sm:$0xff] %v255
                %v257 = vld [vmem:[%s169 + $0x350] sm:$0xff]
                %258 = vst [vmem:[%s170 + $0x1ac] sm:$0xff] %v257
                %v259 = vld [vmem:[%s169 + $0x370] sm:$0xff]
                %260 = vst [vmem:[%s170 + $0x1b8] sm:$0xff] %v259
                %v261 = vld [vmem:[%s169 + $0x378] sm:$0xff]
                %262 = vst [vmem:[%s170 + $0x1c0] sm:$0xff] %v261
                %v263 = vld [vmem:[%s169 + $0x398] sm:$0xff]
                %264 = vst [vmem:[%s170 + $0x1cc] sm:$0xff] %v263
                %v265 = vld [vmem:[%s169 + $0x3a0] sm:$0xff]
                %266 = vst [vmem:[%s170 + $0x1d4] sm:$0xff] %v265
                %v267 = vld [vmem:[%s169 + $0x3c0] sm:$0xff]
                %268 = vst [vmem:[%s170 + $0x1e0] sm:$0xff] %v267
                %v269 = vld [vmem:[%s169 + $0x3c8] sm:$0xff]
                %270 = vst [vmem:[%s170 + $0x1e8] sm:$0xff] %v269
                %v271 = vld [vmem:[%s169 + $0x3e8] sm:$0xff]
                %272 = vst [vmem:[%s170 + $0x1f4] sm:$0xff] %v271
                %v273 = vld [vmem:[%s169 + $0x3f0] sm:$0xff]
                %274 = vst [vmem:[%s170 + $0x1fc] sm:$0xff] %v273
                %v275 = vld [vmem:[%s169 + $0x410] sm:$0xff]
                %276 = vst [vmem:[%s170 + $0x208] sm:$0xff] %v275
                %v277 = vld [vmem:[%s169 + $0x418] sm:$0xff]
                %278 = vst [vmem:[%s170 + $0x210] sm:$0xff] %v277
                %v279 = vld [vmem:[%s169 + $0x438] sm:$0xff]
                %280 = vst [vmem:[%s170 + $0x21c] sm:$0xff] %v279
                %v281 = vld [vmem:[%s169 + $0x440] sm:$0xff]
                %282 = vst [vmem:[%s170 + $0x224] sm:$0xff] %v281
                %v283 = vld [vmem:[%s169 + $0x460] sm:$0xff]
                %284 = vst [vmem:[%s170 + $0x230] sm:$0xff] %v283
                %v285 = vld [vmem:[%s169 + $0x468] sm:$0xff]
                %286 = vst [vmem:[%s170 + $0x238] sm:$0xff] %v285
                %v287 = vld [vmem:[%s169 + $0x488] sm:$0xff]
                %288 = vst [vmem:[%s170 + $0x244] sm:$0xff] %v287
                %v289 = vld [vmem:[%s169 + $0x490] sm:$0xff]
                %290 = vst [vmem:[%s170 + $0x24c] sm:$0xff] %v289
                %v291 = vld [vmem:[%s169 + $0x4b0] sm:$0xff]
                %292 = vst [vmem:[%s170 + $0x258] sm:$0xff] %v291
                %v293 = vld [vmem:[%s169 + $0x4b8] sm:$0xff]
                %294 = vst [vmem:[%s170 + $0x260] sm:$0xff] %v293
                %v295 = vld [vmem:[%s169 + $0x4d8] sm:$0xff]
                %296 = vst [vmem:[%s170 + $0x26c] sm:$0xff] %v295
                %v297 = vld [vmem:[%s169 + $0x4e0] sm:$0xff]
                %298 = vst [vmem:[%s170 + $0x274] sm:$0xff] %v297
              $region37: #{tpu_custom_call.1} parent=31 // loop_footer
                %s168 = sadd.s32 1, %s164
              $region38: #{tpu_custom_call.1} parent=31 // loop_footer_branch
                %163 = sbr.rel target = $region34
              $region39: #{tpu_custom_call.1} parent=31 // loop_exit
                _
              %s300 = ssub.s32 16, 1
              loop: start=0, step=1, limit=1
              $region40: #{tpu_custom_call.1} parent=31 // loop_pre_header
                _
              $region41: #{tpu_custom_call.1} parent=31 // loop_header
                %s302 = sphi 0, %s306
                %p303 = scmp.ge.s32.totalorder %s302, 1
                %s307 = sphi %s161, %s161
                %s308 = sphi %s162, %s162
              $region42: #{tpu_custom_call.1} parent=31 // loop_header_branch
                %305 = sbr.rel (%p303) target = $region46
              $region43: #{tpu_custom_call.1} parent=31 // loop_body
                %v309 = vld [vmem:[%s307] sm:%s300]
                %310 = vst [vmem:[%s308] sm:%s300] %v309
                %v311 = vld [vmem:[%s307 + $0x28] sm:%s300]
                %312 = vst [vmem:[%s308 + $0x14] sm:%s300] %v311
                %v313 = vld [vmem:[%s307 + $0x50] sm:%s300]
                %314 = vst [vmem:[%s308 + $0x28] sm:%s300] %v313
                %v315 = vld [vmem:[%s307 + $0x78] sm:%s300]
                %316 = vst [vmem:[%s308 + $0x3c] sm:%s300] %v315
                %v317 = vld [vmem:[%s307 + $0xa0] sm:%s300]
                %318 = vst [vmem:[%s308 + $0x50] sm:%s300] %v317
                %v319 = vld [vmem:[%s307 + $0xc8] sm:%s300]
                %320 = vst [vmem:[%s308 + $0x64] sm:%s300] %v319
                %v321 = vld [vmem:[%s307 + $0xf0] sm:%s300]
                %322 = vst [vmem:[%s308 + $0x78] sm:%s300] %v321
                %v323 = vld [vmem:[%s307 + $0x118] sm:%s300]
                %324 = vst [vmem:[%s308 + $0x8c] sm:%s300] %v323
                %v325 = vld [vmem:[%s307 + $0x140] sm:%s300]
                %326 = vst [vmem:[%s308 + $0xa0] sm:%s300] %v325
                %v327 = vld [vmem:[%s307 + $0x168] sm:%s300]
                %328 = vst [vmem:[%s308 + $0xb4] sm:%s300] %v327
                %v329 = vld [vmem:[%s307 + $0x190] sm:%s300]
                %330 = vst [vmem:[%s308 + $0xc8] sm:%s300] %v329
                %v331 = vld [vmem:[%s307 + $0x1b8] sm:%s300]
                %332 = vst [vmem:[%s308 + $0xdc] sm:%s300] %v331
                %v333 = vld [vmem:[%s307 + $0x1e0] sm:%s300]
                %334 = vst [vmem:[%s308 + $0xf0] sm:%s300] %v333
                %v335 = vld [vmem:[%s307 + $0x208] sm:%s300]
                %336 = vst [vmem:[%s308 + $0x104] sm:%s300] %v335
                %v337 = vld [vmem:[%s307 + $0x230] sm:%s300]
                %338 = vst [vmem:[%s308 + $0x118] sm:%s300] %v337
                %v339 = vld [vmem:[%s307 + $0x258] sm:%s300]
                %340 = vst [vmem:[%s308 + $0x12c] sm:%s300] %v339
                %v341 = vld [vmem:[%s307 + $0x280] sm:%s300]
                %342 = vst [vmem:[%s308 + $0x140] sm:%s300] %v341
                %v343 = vld [vmem:[%s307 + $0x2a8] sm:%s300]
                %344 = vst [vmem:[%s308 + $0x154] sm:%s300] %v343
                %v345 = vld [vmem:[%s307 + $0x2d0] sm:%s300]
                %346 = vst [vmem:[%s308 + $0x168] sm:%s300] %v345
                %v347 = vld [vmem:[%s307 + $0x2f8] sm:%s300]
                %348 = vst [vmem:[%s308 + $0x17c] sm:%s300] %v347
                %v349 = vld [vmem:[%s307 + $0x320] sm:%s300]
                %350 = vst [vmem:[%s308 + $0x190] sm:%s300] %v349
                %v351 = vld [vmem:[%s307 + $0x348] sm:%s300]
                %352 = vst [vmem:[%s308 + $0x1a4] sm:%s300] %v351
                %v353 = vld [vmem:[%s307 + $0x370] sm:%s300]
                %354 = vst [vmem:[%s308 + $0x1b8] sm:%s300] %v353
                %v355 = vld [vmem:[%s307 + $0x398] sm:%s300]
                %356 = vst [vmem:[%s308 + $0x1cc] sm:%s300] %v355
                %v357 = vld [vmem:[%s307 + $0x3c0] sm:%s300]
                %358 = vst [vmem:[%s308 + $0x1e0] sm:%s300] %v357
                %v359 = vld [vmem:[%s307 + $0x3e8] sm:%s300]
                %360 = vst [vmem:[%s308 + $0x1f4] sm:%s300] %v359
                %v361 = vld [vmem:[%s307 + $0x410] sm:%s300]
                %362 = vst [vmem:[%s308 + $0x208] sm:%s300] %v361
                %v363 = vld [vmem:[%s307 + $0x438] sm:%s300]
                %364 = vst [vmem:[%s308 + $0x21c] sm:%s300] %v363
                %v365 = vld [vmem:[%s307 + $0x460] sm:%s300]
                %366 = vst [vmem:[%s308 + $0x230] sm:%s300] %v365
                %v367 = vld [vmem:[%s307 + $0x488] sm:%s300]
                %368 = vst [vmem:[%s308 + $0x244] sm:%s300] %v367
                %v369 = vld [vmem:[%s307 + $0x4b0] sm:%s300]
                %370 = vst [vmem:[%s308 + $0x258] sm:%s300] %v369
                %v371 = vld [vmem:[%s307 + $0x4d8] sm:%s300]
                %372 = vst [vmem:[%s308 + $0x26c] sm:%s300] %v371
              $region44: #{tpu_custom_call.1} parent=31 // loop_footer
                %s306 = sadd.s32 1, %s302
              $region45: #{tpu_custom_call.1} parent=31 // loop_footer_branch
                %301 = sbr.rel target = $region41
              $region46: #{tpu_custom_call.1} parent=31 // loop_exit
                _
            $region32: #{tpu_custom_call.1} parent=27 // pred_fallthru
              _
          $region28: #{tpu_custom_call.1} parent=23 // pred_fallthru
            _
          %373 = vnop
        $region24: #{tpu_custom_call.1} parent=15 // pred_fallthru
          _
      $region16: #{tpu_custom_call.1} parent=5 // pred_fallthru
        _
      %p374 = scmp.le.s32.totalorder 1, %s8
      %p375 = scmp.lt.s32.totalorder %s8, 3
      %p376 = pnand %p374, %p375
      %p377 = pneg %p376
      // Predicated region
      $region47: #{tpu_custom_call.1} parent=5 // pred_check
        _
      $region48: #{tpu_custom_call.1} parent=5 // pred_check_branch
        %379 = sbr.rel (%p376) target = $region50
      $region49: #{tpu_custom_call.1} parent=5 // pred_region
        %s380 = ssub.s32 %s8, 1
        %s381 = sand.u32 %s70, 1
        %s382 = sand.u32 %s70, 1
        %s383 = smul.addr %s382, 640
        %s384 = scalar_lea.vmem [#allocation3], %s383
        // Predicated region
        $region51: #{tpu_custom_call.1} parent=49 // pred_check
          %p385 = pneg %p83
        $region52: #{tpu_custom_call.1} parent=49 // pred_check_branch
          %387 = sbr.rel (%p385) target = $region54
        $region53: #{tpu_custom_call.1} parent=49 // pred_region
          _
        $region54: #{tpu_custom_call.1} parent=49 // pred_fallthru
          _
        %s388 = smul.u32 80, %s20
        %p389 = scmp.lt.s32.totalorder %s18, 0
        %s390 = scalar_select %p389, %s18, 0
        %p391 = scmp.lt.s32.totalorder %s388, 159
        %s392 = scalar_select %p391, %s388, 159
        %s393 = smul.addr %s392, 2
        %s394 = smul.addr %s390, 320
        %s395 = sadd.s32 %s393, %s394
        %s396 = smul.addr %s395, 4
        %s397 = scalar_lea.vmem %s0, %s396
        %p398 = pneg %p55
        %p399 = pneg %p52
        %s400 = sand.u32 %s70, 1
        %s401 = sand.u32 %s70, 1
        %s402 = smul.addr %s401, 640
        %s403 = scalar_lea.vmem [#allocation3], %s402
        %p404 = pneg %p83
        %p405 = pneg %p80
        %p406 = pneg %p111
        %p407 = pneg %p108
        %s408 = smul.u32 32, %s19
        %p409 = scmp.lt.s32.totalorder %s18, 0
        %s410 = scalar_select %p409, %s18, 0
        %p411 = scmp.lt.s32.totalorder %s408, 31
        %s412 = scalar_select %p411, %s408, 31
        %s413 = smul.addr %s412, 2
        %s414 = smul.addr %s410, 64
        %s415 = sadd.s32 %s413, %s414
        %s416 = smul.addr %s415, 8
        %s417 = scalar_lea.vmem %s2, %s416
        %s418 = smul.u32 80, %s20
        %p419 = scmp.lt.s32.totalorder %s18, 0
        %s420 = scalar_select %p419, %s18, 0
        %p421 = scmp.lt.s32.totalorder %s418, 159
        %s422 = scalar_select %p421, %s418, 159
        %s423 = smul.addr %s422, 2
        %s424 = smul.addr %s420, 320
        %s425 = sadd.s32 %s423, %s424
        %s426 = smul.addr %s425, 4
        %s427 = scalar_lea.vmem %s0, %s426
        %s428 = smul.u32 80, %s20
        %s429 = smul.u32 32, %s19
        %s430 = smul.u32 5, %s20
        %s431 = smul.u32 32, %s19
        %p432 = scmp.lt.s32.totalorder %s18, 0
        %s433 = scalar_select %p432, %s18, 0
        %p434 = scmp.lt.s32.totalorder %s431, 31
        %s435 = scalar_select %p434, %s431, 31
        %s436 = smul.addr %s435, 2
        %s437 = smul.addr %s433, 64
        %s438 = sadd.s32 %s436, %s437
        %s439 = smul.addr %s438, 8
        %s440 = scalar_lea.vmem %s2, %s439
        %s441 = smul.u32 32, %s19
        %p442 = scmp.eq.s32.totalorder %s20, 0
        // Predicated region
        $region55: #{tpu_custom_call.1} parent=49 // pred_check
          %p443 = pneg %p442
        $region56: #{tpu_custom_call.1} parent=49 // pred_check_branch
          %445 = sbr.rel (%p443) target = $region58
        $region57: #{tpu_custom_call.1} parent=49 // pred_region
          %446 = vst [vmem:[#allocation2] sm:$0xff] 0.0
          %vm447 = vcmask 556032
          %448 = vst.msk [vmem:[#allocation2 + $0x8] sm:$0xff] %vm447, 0.0
          %449 = vst [vmem:[#allocation2 + $0x10] sm:$0xff] 0.0
          %450 = vst.msk [vmem:[#allocation2 + $0x18] sm:$0xff] %vm447, 0.0
          %451 = vst [vmem:[#allocation2 + $0x20] sm:$0xff] 0.0
          %452 = vst.msk [vmem:[#allocation2 + $0x28] sm:$0xff] %vm447, 0.0
          %453 = vst [vmem:[#allocation2 + $0x30] sm:$0xff] 0.0
          %454 = vst.msk [vmem:[#allocation2 + $0x38] sm:$0xff] %vm447, 0.0
          %455 = vst [vmem:[#allocation2 + $0x40] sm:$0xff] 0.0
          %456 = vst.msk [vmem:[#allocation2 + $0x48] sm:$0xff] %vm447, 0.0
          %457 = vst [vmem:[#allocation2 + $0x50] sm:$0xff] 0.0
          %458 = vst.msk [vmem:[#allocation2 + $0x58] sm:$0xff] %vm447, 0.0
          %459 = vst [vmem:[#allocation2 + $0x60] sm:$0xff] 0.0
          %460 = vst.msk [vmem:[#allocation2 + $0x68] sm:$0xff] %vm447, 0.0
          %461 = vst [vmem:[#allocation2 + $0x70] sm:$0xff] 0.0
          %462 = vst.msk [vmem:[#allocation2 + $0x78] sm:$0xff] %vm447, 0.0
          %463 = vst [vmem:[#allocation2 + $0x80] sm:$0xff] 0.0
          %464 = vst.msk [vmem:[#allocation2 + $0x88] sm:$0xff] %vm447, 0.0
          %465 = vst [vmem:[#allocation2 + $0x90] sm:$0xff] 0.0
          %466 = vst.msk [vmem:[#allocation2 + $0x98] sm:$0xff] %vm447, 0.0
          %467 = vst [vmem:[#allocation2 + $0xa0] sm:$0xff] 0.0
          %468 = vst.msk [vmem:[#allocation2 + $0xa8] sm:$0xff] %vm447, 0.0
          %469 = vst [vmem:[#allocation2 + $0xb0] sm:$0xff] 0.0
          %470 = vst.msk [vmem:[#allocation2 + $0xb8] sm:$0xff] %vm447, 0.0
          %471 = vst [vmem:[#allocation2 + $0xc0] sm:$0xff] 0.0
          %472 = vst.msk [vmem:[#allocation2 + $0xc8] sm:$0xff] %vm447, 0.0
          %473 = vst [vmem:[#allocation2 + $0xd0] sm:$0xff] 0.0
          %474 = vst.msk [vmem:[#allocation2 + $0xd8] sm:$0xff] %vm447, 0.0
          %475 = vst [vmem:[#allocation2 + $0xe0] sm:$0xff] 0.0
          %476 = vst.msk [vmem:[#allocation2 + $0xe8] sm:$0xff] %vm447, 0.0
          %477 = vst [vmem:[#allocation2 + $0xf0] sm:$0xff] 0.0
          %478 = vst.msk [vmem:[#allocation2 + $0xf8] sm:$0xff] %vm447, 0.0
          %479 = vst [vmem:[#allocation2 + $0x100] sm:$0xff] 0.0
          %480 = vst.msk [vmem:[#allocation2 + $0x108] sm:$0xff] %vm447, 0.0
          %481 = vst [vmem:[#allocation2 + $0x110] sm:$0xff] 0.0
          %482 = vst.msk [vmem:[#allocation2 + $0x118] sm:$0xff] %vm447, 0.0
          %483 = vst [vmem:[#allocation2 + $0x120] sm:$0xff] 0.0
          %484 = vst.msk [vmem:[#allocation2 + $0x128] sm:$0xff] %vm447, 0.0
          %485 = vst [vmem:[#allocation2 + $0x130] sm:$0xff] 0.0
          %486 = vst.msk [vmem:[#allocation2 + $0x138] sm:$0xff] %vm447, 0.0
          %487 = vst [vmem:[#allocation2 + $0x140] sm:$0xff] 0.0
          %488 = vst.msk [vmem:[#allocation2 + $0x148] sm:$0xff] %vm447, 0.0
          %489 = vst [vmem:[#allocation2 + $0x150] sm:$0xff] 0.0
          %490 = vst.msk [vmem:[#allocation2 + $0x158] sm:$0xff] %vm447, 0.0
          %491 = vst [vmem:[#allocation2 + $0x160] sm:$0xff] 0.0
          %492 = vst.msk [vmem:[#allocation2 + $0x168] sm:$0xff] %vm447, 0.0
          %493 = vst [vmem:[#allocation2 + $0x170] sm:$0xff] 0.0
          %494 = vst.msk [vmem:[#allocation2 + $0x178] sm:$0xff] %vm447, 0.0
          %495 = vst [vmem:[#allocation2 + $0x180] sm:$0xff] 0.0
          %496 = vst.msk [vmem:[#allocation2 + $0x188] sm:$0xff] %vm447, 0.0
          %497 = vst [vmem:[#allocation2 + $0x190] sm:$0xff] 0.0
          %498 = vst.msk [vmem:[#allocation2 + $0x198] sm:$0xff] %vm447, 0.0
          %499 = vst [vmem:[#allocation2 + $0x1a0] sm:$0xff] 0.0
          %500 = vst.msk [vmem:[#allocation2 + $0x1a8] sm:$0xff] %vm447, 0.0
          %501 = vst [vmem:[#allocation2 + $0x1b0] sm:$0xff] 0.0
          %502 = vst.msk [vmem:[#allocation2 + $0x1b8] sm:$0xff] %vm447, 0.0
          %503 = vst [vmem:[#allocation2 + $0x1c0] sm:$0xff] 0.0
          %504 = vst.msk [vmem:[#allocation2 + $0x1c8] sm:$0xff] %vm447, 0.0
          %505 = vst [vmem:[#allocation2 + $0x1d0] sm:$0xff] 0.0
          %506 = vst.msk [vmem:[#allocation2 + $0x1d8] sm:$0xff] %vm447, 0.0
          %507 = vst [vmem:[#allocation2 + $0x1e0] sm:$0xff] 0.0
          %508 = vst.msk [vmem:[#allocation2 + $0x1e8] sm:$0xff] %vm447, 0.0
          %509 = vst [vmem:[#allocation2 + $0x1f0] sm:$0xff] 0.0
          %510 = vst.msk [vmem:[#allocation2 + $0x1f8] sm:$0xff] %vm447, 0.0
        $region58: #{tpu_custom_call.1} parent=49 // pred_fallthru
          _
        %v511 = vld [vmem:[#allocation2] sm:$0xff]
        %v512 = vld [vmem:[#allocation2 + $0x8] sm:$0xff]
        %v513 = vld [vmem:[#allocation2 + $0x10] sm:$0xff]
        %v514 = vld [vmem:[#allocation2 + $0x18] sm:$0xff]
        %v515 = vld [vmem:[#allocation2 + $0x20] sm:$0xff]
        %v516 = vld [vmem:[#allocation2 + $0x28] sm:$0xff]
        %v517 = vld [vmem:[#allocation2 + $0x30] sm:$0xff]
        %v518 = vld [vmem:[#allocation2 + $0x38] sm:$0xff]
        %v519 = vld [vmem:[#allocation2 + $0x40] sm:$0xff]
        %v520 = vld [vmem:[#allocation2 + $0x48] sm:$0xff]
        %v521 = vld [vmem:[#allocation2 + $0x50] sm:$0xff]
        %v522 = vld [vmem:[#allocation2 + $0x58] sm:$0xff]
        %v523 = vld [vmem:[#allocation2 + $0x60] sm:$0xff]
        %v524 = vld [vmem:[#allocation2 + $0x68] sm:$0xff]
        %v525 = vld [vmem:[#allocation2 + $0x70] sm:$0xff]
        %v526 = vld [vmem:[#allocation2 + $0x78] sm:$0xff]
        %v527 = vld [vmem:[#allocation2 + $0x80] sm:$0xff]
        %v528 = vld [vmem:[#allocation2 + $0x88] sm:$0xff]
        %v529 = vld [vmem:[#allocation2 + $0x90] sm:$0xff]
        %v530 = vld [vmem:[#allocation2 + $0x98] sm:$0xff]
        %v531 = vld [vmem:[#allocation2 + $0xa0] sm:$0xff]
        %v532 = vld [vmem:[#allocation2 + $0xa8] sm:$0xff]
        %v533 = vld [vmem:[#allocation2 + $0xb0] sm:$0xff]
        %v534 = vld [vmem:[#allocation2 + $0xb8] sm:$0xff]
        %v535 = vld [vmem:[#allocation2 + $0xc0] sm:$0xff]
        %v536 = vld [vmem:[#allocation2 + $0xc8] sm:$0xff]
        %v537 = vld [vmem:[#allocation2 + $0xd0] sm:$0xff]
        %v538 = vld [vmem:[#allocation2 + $0xd8] sm:$0xff]
        %v539 = vld [vmem:[#allocation2 + $0xe0] sm:$0xff]
        %v540 = vld [vmem:[#allocation2 + $0xe8] sm:$0xff]
        %v541 = vld [vmem:[#allocation2 + $0xf0] sm:$0xff]
        %v542 = vld [vmem:[#allocation2 + $0xf8] sm:$0xff]
        %v543 = vld [vmem:[#allocation2 + $0x100] sm:$0xff]
        %v544 = vld [vmem:[#allocation2 + $0x108] sm:$0xff]
        %v545 = vld [vmem:[#allocation2 + $0x110] sm:$0xff]
        %v546 = vld [vmem:[#allocation2 + $0x118] sm:$0xff]
        %v547 = vld [vmem:[#allocation2 + $0x120] sm:$0xff]
        %v548 = vld [vmem:[#allocation2 + $0x128] sm:$0xff]
        %v549 = vld [vmem:[#allocation2 + $0x130] sm:$0xff]
        %v550 = vld [vmem:[#allocation2 + $0x138] sm:$0xff]
        %v551 = vld [vmem:[#allocation2 + $0x140] sm:$0xff]
        %v552 = vld [vmem:[#allocation2 + $0x148] sm:$0xff]
        %v553 = vld [vmem:[#allocation2 + $0x150] sm:$0xff]
        %v554 = vld [vmem:[#allocation2 + $0x158] sm:$0xff]
        %v555 = vld [vmem:[#allocation2 + $0x160] sm:$0xff]
        %v556 = vld [vmem:[#allocation2 + $0x168] sm:$0xff]
        %v557 = vld [vmem:[#allocation2 + $0x170] sm:$0xff]
        %v558 = vld [vmem:[#allocation2 + $0x178] sm:$0xff]
        %v559 = vld [vmem:[#allocation2 + $0x180] sm:$0xff]
        %v560 = vld [vmem:[#allocation2 + $0x188] sm:$0xff]
        %v561 = vld [vmem:[#allocation2 + $0x190] sm:$0xff]
        %v562 = vld [vmem:[#allocation2 + $0x198] sm:$0xff]
        %v563 = vld [vmem:[#allocation2 + $0x1a0] sm:$0xff]
        %v564 = vld [vmem:[#allocation2 + $0x1a8] sm:$0xff]
        %v565 = vld [vmem:[#allocation2 + $0x1b0] sm:$0xff]
        %v566 = vld [vmem:[#allocation2 + $0x1b8] sm:$0xff]
        %v567 = vld [vmem:[#allocation2 + $0x1c0] sm:$0xff]
        %v568 = vld [vmem:[#allocation2 + $0x1c8] sm:$0xff]
        %v569 = vld [vmem:[#allocation2 + $0x1d0] sm:$0xff]
        %v570 = vld [vmem:[#allocation2 + $0x1d8] sm:$0xff]
        %v571 = vld [vmem:[#allocation2 + $0x1e0] sm:$0xff]
        %v572 = vld [vmem:[#allocation2 + $0x1e8] sm:$0xff]
        %v573 = vld [vmem:[#allocation2 + $0x1f0] sm:$0xff]
        %v574 = vld [vmem:[#allocation2 + $0x1f8] sm:$0xff]
        %v575 = vld [vmem:[%s384] sm:$0xff]
        %v576 = vld [vmem:[%s384 + $0x8] sm:$0xff]
        %v577 = vld [vmem:[%s384 + $0x10] sm:$0xf]
        %v578 = vld [vmem:[%s384 + $0x14] sm:$0xff]
        %v579 = vld [vmem:[%s384 + $0x1c] sm:$0xff]
        %v580 = vld [vmem:[%s384 + $0x24] sm:$0xf]
        %v581 = vld [vmem:[%s384 + $0x28] sm:$0xff]
        %v582 = vld [vmem:[%s384 + $0x30] sm:$0xff]
        %v583 = vld [vmem:[%s384 + $0x38] sm:$0xf]
        %v584 = vld [vmem:[%s384 + $0x3c] sm:$0xff]
        %v585 = vld [vmem:[%s384 + $0x44] sm:$0xff]
        %v586 = vld [vmem:[%s384 + $0x4c] sm:$0xf]
        %v587 = vld [vmem:[%s384 + $0x50] sm:$0xff]
        %v588 = vld [vmem:[%s384 + $0x58] sm:$0xff]
        %v589 = vld [vmem:[%s384 + $0x60] sm:$0xf]
        %v590 = vld [vmem:[%s384 + $0x64] sm:$0xff]
        %v591 = vld [vmem:[%s384 + $0x6c] sm:$0xff]
        %v592 = vld [vmem:[%s384 + $0x74] sm:$0xf]
        %v593 = vld [vmem:[%s384 + $0x78] sm:$0xff]
        %v594 = vld [vmem:[%s384 + $0x80] sm:$0xff]
        %v595 = vld [vmem:[%s384 + $0x88] sm:$0xf]
        %v596 = vld [vmem:[%s384 + $0x8c] sm:$0xff]
        %v597 = vld [vmem:[%s384 + $0x94] sm:$0xff]
        %v598 = vld [vmem:[%s384 + $0x9c] sm:$0xf]
        %v599 = vld [vmem:[%s384 + $0xa0] sm:$0xff]
        %v600 = vld [vmem:[%s384 + $0xa8] sm:$0xff]
        %v601 = vld [vmem:[%s384 + $0xb0] sm:$0xf]
        %v602 = vld [vmem:[%s384 + $0xb4] sm:$0xff]
        %v603 = vld [vmem:[%s384 + $0xbc] sm:$0xff]
        %v604 = vld [vmem:[%s384 + $0xc4] sm:$0xf]
        %v605 = vld [vmem:[%s384 + $0xc8] sm:$0xff]
        %v606 = vld [vmem:[%s384 + $0xd0] sm:$0xff]
        %v607 = vld [vmem:[%s384 + $0xd8] sm:$0xf]
        %v608 = vld [vmem:[%s384 + $0xdc] sm:$0xff]
        %v609 = vld [vmem:[%s384 + $0xe4] sm:$0xff]
        %v610 = vld [vmem:[%s384 + $0xec] sm:$0xf]
        %v611 = vld [vmem:[%s384 + $0xf0] sm:$0xff]
        %v612 = vld [vmem:[%s384 + $0xf8] sm:$0xff]
        %v613 = vld [vmem:[%s384 + $0x100] sm:$0xf]
        %v614 = vld [vmem:[%s384 + $0x104] sm:$0xff]
        %v615 = vld [vmem:[%s384 + $0x10c] sm:$0xff]
        %v616 = vld [vmem:[%s384 + $0x114] sm:$0xf]
        %v617 = vld [vmem:[%s384 + $0x118] sm:$0xff]
        %v618 = vld [vmem:[%s384 + $0x120] sm:$0xff]
        %v619 = vld [vmem:[%s384 + $0x128] sm:$0xf]
        %v620 = vld [vmem:[%s384 + $0x12c] sm:$0xff]
        %v621 = vld [vmem:[%s384 + $0x134] sm:$0xff]
        %v622 = vld [vmem:[%s384 + $0x13c] sm:$0xf]
        %v623 = vld [vmem:[%s384 + $0x140] sm:$0xff]
        %v624 = vld [vmem:[%s384 + $0x148] sm:$0xff]
        %v625 = vld [vmem:[%s384 + $0x150] sm:$0xf]
        %v626 = vld [vmem:[%s384 + $0x154] sm:$0xff]
        %v627 = vld [vmem:[%s384 + $0x15c] sm:$0xff]
        %v628 = vld [vmem:[%s384 + $0x164] sm:$0xf]
        %v629 = vld [vmem:[%s384 + $0x168] sm:$0xff]
        %v630 = vld [vmem:[%s384 + $0x170] sm:$0xff]
        %v631 = vld [vmem:[%s384 + $0x178] sm:$0xf]
        %v632 = vld [vmem:[%s384 + $0x17c] sm:$0xff]
        %v633 = vld [vmem:[%s384 + $0x184] sm:$0xff]
        %v634 = vld [vmem:[%s384 + $0x18c] sm:$0xf]
        %v635 = vld [vmem:[%s384 + $0x190] sm:$0xff]
        %v636 = vld [vmem:[%s384 + $0x198] sm:$0xff]
        %v637 = vld [vmem:[%s384 + $0x1a0] sm:$0xf]
        %v638 = vld [vmem:[%s384 + $0x1a4] sm:$0xff]
        %v639 = vld [vmem:[%s384 + $0x1ac] sm:$0xff]
        %v640 = vld [vmem:[%s384 + $0x1b4] sm:$0xf]
        %v641 = vld [vmem:[%s384 + $0x1b8] sm:$0xff]
        %v642 = vld [vmem:[%s384 + $0x1c0] sm:$0xff]
        %v643 = vld [vmem:[%s384 + $0x1c8] sm:$0xf]
        %v644 = vld [vmem:[%s384 + $0x1cc] sm:$0xff]
        %v645 = vld [vmem:[%s384 + $0x1d4] sm:$0xff]
        %v646 = vld [vmem:[%s384 + $0x1dc] sm:$0xf]
        %v647 = vld [vmem:[%s384 + $0x1e0] sm:$0xff]
        %v648 = vld [vmem:[%s384 + $0x1e8] sm:$0xff]
        %v649 = vld [vmem:[%s384 + $0x1f0] sm:$0xf]
        %v650 = vld [vmem:[%s384 + $0x1f4] sm:$0xff]
        %v651 = vld [vmem:[%s384 + $0x1fc] sm:$0xff]
        %v652 = vld [vmem:[%s384 + $0x204] sm:$0xf]
        %v653 = vld [vmem:[%s384 + $0x208] sm:$0xff]
        %v654 = vld [vmem:[%s384 + $0x210] sm:$0xff]
        %v655 = vld [vmem:[%s384 + $0x218] sm:$0xf]
        %v656 = vld [vmem:[%s384 + $0x21c] sm:$0xff]
        %v657 = vld [vmem:[%s384 + $0x224] sm:$0xff]
        %v658 = vld [vmem:[%s384 + $0x22c] sm:$0xf]
        %v659 = vld [vmem:[%s384 + $0x230] sm:$0xff]
        %v660 = vld [vmem:[%s384 + $0x238] sm:$0xff]
        %v661 = vld [vmem:[%s384 + $0x240] sm:$0xf]
        %v662 = vld [vmem:[%s384 + $0x244] sm:$0xff]
        %v663 = vld [vmem:[%s384 + $0x24c] sm:$0xff]
        %v664 = vld [vmem:[%s384 + $0x254] sm:$0xf]
        %v665 = vld [vmem:[%s384 + $0x258] sm:$0xff]
        %v666 = vld [vmem:[%s384 + $0x260] sm:$0xff]
        %v667 = vld [vmem:[%s384 + $0x268] sm:$0xf]
        %v668 = vld [vmem:[%s384 + $0x26c] sm:$0xff]
        %v669 = vld [vmem:[%s384 + $0x274] sm:$0xff]
        %v670 = vld [vmem:[%s384 + $0x27c] sm:$0xf]
        %v671 = vld [vmem:[%s427] sm:$0xff]
        %v672 = vld [vmem:[%s427 + $0x8] sm:$0xff]
        %v673 = vld [vmem:[%s427 + $0x10] sm:$0xff]
        %v674 = vld [vmem:[%s427 + $0x18] sm:$0xff]
        %v675 = vld [vmem:[%s427 + $0x20] sm:$0xff]
        %v676 = vld [vmem:[%s427 + $0x28] sm:$0xff]
        %v677 = vld [vmem:[%s427 + $0x30] sm:$0xff]
        %v678 = vld [vmem:[%s427 + $0x38] sm:$0xff]
        %v679 = vld [vmem:[%s427 + $0x40] sm:$0xff]
        %v680 = vld [vmem:[%s427 + $0x48] sm:$0xff]
        %v681 = vld [vmem:[%s427 + $0x50] sm:$0xff]
        %v682 = vld [vmem:[%s427 + $0x58] sm:$0xff]
        %v683 = vld [vmem:[%s427 + $0x60] sm:$0xff]
        %v684 = vld [vmem:[%s427 + $0x68] sm:$0xff]
        %v685 = vld [vmem:[%s427 + $0x70] sm:$0xff]
        %v686 = vld [vmem:[%s427 + $0x78] sm:$0xff]
        %v687 = vld [vmem:[%s427 + $0x80] sm:$0xff]
        %v688 = vld [vmem:[%s427 + $0x88] sm:$0xff]
        %v689 = vld [vmem:[%s427 + $0x90] sm:$0xff]
        %v690 = vld [vmem:[%s427 + $0x98] sm:$0xff]
        %v691 = vld [vmem:[%s427 + $0xa0] sm:$0xff]
        %v692 = vld [vmem:[%s427 + $0xa8] sm:$0xff]
        %v693 = vld [vmem:[%s427 + $0xb0] sm:$0xff]
        %v694 = vld [vmem:[%s427 + $0xb8] sm:$0xff]
        %v695 = vld [vmem:[%s427 + $0xc0] sm:$0xff]
        %v696 = vld [vmem:[%s427 + $0xc8] sm:$0xff]
        %v697 = vld [vmem:[%s427 + $0xd0] sm:$0xff]
        %v698 = vld [vmem:[%s427 + $0xd8] sm:$0xff]
        %v699 = vld [vmem:[%s427 + $0xe0] sm:$0xff]
        %v700 = vld [vmem:[%s427 + $0xe8] sm:$0xff]
        %v701 = vld [vmem:[%s427 + $0xf0] sm:$0xff]
        %v702 = vld [vmem:[%s427 + $0xf8] sm:$0xff]
        %v703 = vld [vmem:[%s427 + $0x100] sm:$0xff]
        %v704 = vld [vmem:[%s427 + $0x108] sm:$0xff]
        %v705 = vld [vmem:[%s427 + $0x110] sm:$0xff]
        %v706 = vld [vmem:[%s427 + $0x118] sm:$0xff]
        %v707 = vld [vmem:[%s427 + $0x120] sm:$0xff]
        %v708 = vld [vmem:[%s427 + $0x128] sm:$0xff]
        %v709 = vld [vmem:[%s427 + $0x130] sm:$0xff]
        %v710 = vld [vmem:[%s427 + $0x138] sm:$0xff]
        %v711 = vld [vmem:[%s427 + $0x140] sm:$0xff]
        %v712 = vld [vmem:[%s427 + $0x148] sm:$0xff]
        %v713 = vld [vmem:[%s427 + $0x150] sm:$0xff]
        %v714 = vld [vmem:[%s427 + $0x158] sm:$0xff]
        %v715 = vld [vmem:[%s427 + $0x160] sm:$0xff]
        %v716 = vld [vmem:[%s427 + $0x168] sm:$0xff]
        %v717 = vld [vmem:[%s427 + $0x170] sm:$0xff]
        %v718 = vld [vmem:[%s427 + $0x178] sm:$0xff]
        %v719 = vld [vmem:[%s427 + $0x180] sm:$0xff]
        %v720 = vld [vmem:[%s427 + $0x188] sm:$0xff]
        %v721 = vld [vmem:[%s427 + $0x190] sm:$0xff]
        %v722 = vld [vmem:[%s427 + $0x198] sm:$0xff]
        %v723 = vld [vmem:[%s427 + $0x1a0] sm:$0xff]
        %v724 = vld [vmem:[%s427 + $0x1a8] sm:$0xff]
        %v725 = vld [vmem:[%s427 + $0x1b0] sm:$0xff]
        %v726 = vld [vmem:[%s427 + $0x1b8] sm:$0xff]
        %v727 = vld [vmem:[%s427 + $0x1c0] sm:$0xff]
        %v728 = vld [vmem:[%s427 + $0x1c8] sm:$0xff]
        %v729 = vld [vmem:[%s427 + $0x1d0] sm:$0xff]
        %v730 = vld [vmem:[%s427 + $0x1d8] sm:$0xff]
        %v731 = vld [vmem:[%s427 + $0x1e0] sm:$0xff]
        %v732 = vld [vmem:[%s427 + $0x1e8] sm:$0xff]
        %v733 = vld [vmem:[%s427 + $0x1f0] sm:$0xff]
        %v734 = vld [vmem:[%s427 + $0x1f8] sm:$0xff]
        %v735 = vld [vmem:[%s427 + $0x200] sm:$0xff]
        %v736 = vld [vmem:[%s427 + $0x208] sm:$0xff]
        %v737 = vld [vmem:[%s427 + $0x210] sm:$0xff]
        %v738 = vld [vmem:[%s427 + $0x218] sm:$0xff]
        %v739 = vld [vmem:[%s427 + $0x220] sm:$0xff]
        %v740 = vld [vmem:[%s427 + $0x228] sm:$0xff]
        %v741 = vld [vmem:[%s427 + $0x230] sm:$0xff]
        %v742 = vld [vmem:[%s427 + $0x238] sm:$0xff]
        %v743 = vld [vmem:[%s427 + $0x240] sm:$0xff]
        %v744 = vld [vmem:[%s427 + $0x248] sm:$0xff]
        %v745 = vld [vmem:[%s427 + $0x250] sm:$0xff]
        %v746 = vld [vmem:[%s427 + $0x258] sm:$0xff]
        %v747 = vld [vmem:[%s427 + $0x260] sm:$0xff]
        %v748 = vld [vmem:[%s427 + $0x268] sm:$0xff]
        %v749 = vld [vmem:[%s427 + $0x270] sm:$0xff]
        %v750 = vld [vmem:[%s427 + $0x278] sm:$0xff]
        %v847 = vunpack.c.l.b16 %v575
        %v848 = vunpack.c.h.b16 %v575
        %v849 = vunpack.c.l.b16 %v576
        %v850 = vunpack.c.h.b16 %v576
        %v851 = vunpack.c.l.b16 %v577
        %v852 = vunpack.c.l.b16 %v578
        %v853 = vunpack.c.h.b16 %v578
        %v854 = vunpack.c.l.b16 %v579
        %v855 = vunpack.c.h.b16 %v579
        %v856 = vunpack.c.l.b16 %v580
        %v857 = vunpack.c.l.b16 %v581
        %v858 = vunpack.c.h.b16 %v581
        %v859 = vunpack.c.l.b16 %v582
        %v860 = vunpack.c.h.b16 %v582
        %v861 = vunpack.c.l.b16 %v583
        %v862 = vunpack.c.l.b16 %v584
        %v863 = vunpack.c.h.b16 %v584
        %v864 = vunpack.c.l.b16 %v585
        %v865 = vunpack.c.h.b16 %v585
        %v866 = vunpack.c.l.b16 %v586
        %v867 = vunpack.c.l.b16 %v587
        %v868 = vunpack.c.h.b16 %v587
        %v869 = vunpack.c.l.b16 %v588
        %v870 = vunpack.c.h.b16 %v588
        %v871 = vunpack.c.l.b16 %v589
        %v872 = vunpack.c.l.b16 %v590
        %v873 = vunpack.c.h.b16 %v590
        %v874 = vunpack.c.l.b16 %v591
        %v875 = vunpack.c.h.b16 %v591
        %v876 = vunpack.c.l.b16 %v592
        %v877 = vunpack.c.l.b16 %v593
        %v878 = vunpack.c.h.b16 %v593
        %v879 = vunpack.c.l.b16 %v594
        %v880 = vunpack.c.h.b16 %v594
        %v881 = vunpack.c.l.b16 %v595
        %v882 = vunpack.c.l.b16 %v596
        %v883 = vunpack.c.h.b16 %v596
        %v884 = vunpack.c.l.b16 %v597
        %v885 = vunpack.c.h.b16 %v597
        %v886 = vunpack.c.l.b16 %v598
        %v887 = vunpack.c.l.b16 %v599
        %v888 = vunpack.c.h.b16 %v599
        %v889 = vunpack.c.l.b16 %v600
        %v890 = vunpack.c.h.b16 %v600
        %v891 = vunpack.c.l.b16 %v601
        %v892 = vunpack.c.l.b16 %v602
        %v893 = vunpack.c.h.b16 %v602
        %v894 = vunpack.c.l.b16 %v603
        %v895 = vunpack.c.h.b16 %v603
        %v896 = vunpack.c.l.b16 %v604
        %v897 = vunpack.c.l.b16 %v605
        %v898 = vunpack.c.h.b16 %v605
        %v899 = vunpack.c.l.b16 %v606
        %v900 = vunpack.c.h.b16 %v606
        %v901 = vunpack.c.l.b16 %v607
        %v902 = vunpack.c.l.b16 %v608
        %v903 = vunpack.c.h.b16 %v608
        %v904 = vunpack.c.l.b16 %v609
        %v905 = vunpack.c.h.b16 %v609
        %v906 = vunpack.c.l.b16 %v610
        %v907 = vunpack.c.l.b16 %v611
        %v908 = vunpack.c.h.b16 %v611
        %v909 = vunpack.c.l.b16 %v612
        %v910 = vunpack.c.h.b16 %v612
        %v911 = vunpack.c.l.b16 %v613
        %v912 = vunpack.c.l.b16 %v614
        %v913 = vunpack.c.h.b16 %v614
        %v914 = vunpack.c.l.b16 %v615
        %v915 = vunpack.c.h.b16 %v615
        %v916 = vunpack.c.l.b16 %v616
        %v917 = vunpack.c.l.b16 %v617
        %v918 = vunpack.c.h.b16 %v617
        %v919 = vunpack.c.l.b16 %v618
        %v920 = vunpack.c.h.b16 %v618
        %v921 = vunpack.c.l.b16 %v619
        %v922 = vunpack.c.l.b16 %v620
        %v923 = vunpack.c.h.b16 %v620
        %v924 = vunpack.c.l.b16 %v621
        %v925 = vunpack.c.h.b16 %v621
        %v926 = vunpack.c.l.b16 %v622
        %v927 = vunpack.c.l.b16 %v623
        %v928 = vunpack.c.h.b16 %v623
        %v929 = vunpack.c.l.b16 %v624
        %v930 = vunpack.c.h.b16 %v624
        %v931 = vunpack.c.l.b16 %v625
        %v932 = vunpack.c.l.b16 %v626
        %v933 = vunpack.c.h.b16 %v626
        %v934 = vunpack.c.l.b16 %v627
        %v935 = vunpack.c.h.b16 %v627
        %v936 = vunpack.c.l.b16 %v628
        %v937 = vunpack.c.l.b16 %v629
        %v938 = vunpack.c.h.b16 %v629
        %v939 = vunpack.c.l.b16 %v630
        %v940 = vunpack.c.h.b16 %v630
        %v941 = vunpack.c.l.b16 %v631
        %v942 = vunpack.c.l.b16 %v632
        %v943 = vunpack.c.h.b16 %v632
        %v944 = vunpack.c.l.b16 %v633
        %v945 = vunpack.c.h.b16 %v633
        %v946 = vunpack.c.l.b16 %v634
        %v947 = vunpack.c.l.b16 %v635
        %v948 = vunpack.c.h.b16 %v635
        %v949 = vunpack.c.l.b16 %v636
        %v950 = vunpack.c.h.b16 %v636
        %v951 = vunpack.c.l.b16 %v637
        %v952 = vunpack.c.l.b16 %v638
        %v953 = vunpack.c.h.b16 %v638
        %v954 = vunpack.c.l.b16 %v639
        %v955 = vunpack.c.h.b16 %v639
        %v956 = vunpack.c.l.b16 %v640
        %v957 = vunpack.c.l.b16 %v641
        %v958 = vunpack.c.h.b16 %v641
        %v959 = vunpack.c.l.b16 %v642
        %v960 = vunpack.c.h.b16 %v642
        %v961 = vunpack.c.l.b16 %v643
        %v962 = vunpack.c.l.b16 %v644
        %v963 = vunpack.c.h.b16 %v644
        %v964 = vunpack.c.l.b16 %v645
        %v965 = vunpack.c.h.b16 %v645
        %v966 = vunpack.c.l.b16 %v646
        %v967 = vunpack.c.l.b16 %v647
        %v968 = vunpack.c.h.b16 %v647
        %v969 = vunpack.c.l.b16 %v648
        %v970 = vunpack.c.h.b16 %v648
        %v971 = vunpack.c.l.b16 %v649
        %v972 = vunpack.c.l.b16 %v650
        %v973 = vunpack.c.h.b16 %v650
        %v974 = vunpack.c.l.b16 %v651
        %v975 = vunpack.c.h.b16 %v651
        %v976 = vunpack.c.l.b16 %v652
        %v977 = vunpack.c.l.b16 %v653
        %v978 = vunpack.c.h.b16 %v653
        %v979 = vunpack.c.l.b16 %v654
        %v980 = vunpack.c.h.b16 %v654
        %v981 = vunpack.c.l.b16 %v655
        %v982 = vunpack.c.l.b16 %v656
        %v983 = vunpack.c.h.b16 %v656
        %v984 = vunpack.c.l.b16 %v657
        %v985 = vunpack.c.h.b16 %v657
        %v986 = vunpack.c.l.b16 %v658
        %v987 = vunpack.c.l.b16 %v659
        %v988 = vunpack.c.h.b16 %v659
        %v989 = vunpack.c.l.b16 %v660
        %v990 = vunpack.c.h.b16 %v660
        %v991 = vunpack.c.l.b16 %v661
        %v992 = vunpack.c.l.b16 %v662
        %v993 = vunpack.c.h.b16 %v662
        %v994 = vunpack.c.l.b16 %v663
        %v995 = vunpack.c.h.b16 %v663
        %v996 = vunpack.c.l.b16 %v664
        %v997 = vunpack.c.l.b16 %v665
        %v998 = vunpack.c.h.b16 %v665
        %v999 = vunpack.c.l.b16 %v666
        %v1000 = vunpack.c.h.b16 %v666
        %v1001 = vunpack.c.l.b16 %v667
        %v1002 = vunpack.c.l.b16 %v668
        %v1003 = vunpack.c.h.b16 %v668
        %v1004 = vunpack.c.l.b16 %v669
        %v1005 = vunpack.c.h.b16 %v669
        %v1006 = vunpack.c.l.b16 %v670
        %v1007 = vpack.c.b16 %v852, %v847
        %v1008 = vpack.c.b16 %v853, %v848
        %v1009 = vpack.c.b16 %v854, %v849
        %v1010 = vpack.c.b16 %v855, %v850
        %v1011 = vpack.c.b16 %v856, %v851
        %v1012 = vpack.c.b16 %v862, %v857
        %v1013 = vpack.c.b16 %v863, %v858
        %v1014 = vpack.c.b16 %v864, %v859
        %v1015 = vpack.c.b16 %v865, %v860
        %v1016 = vpack.c.b16 %v866, %v861
        %v1017 = vpack.c.b16 %v872, %v867
        %v1018 = vpack.c.b16 %v873, %v868
        %v1019 = vpack.c.b16 %v874, %v869
        %v1020 = vpack.c.b16 %v875, %v870
        %v1021 = vpack.c.b16 %v876, %v871
        %v1022 = vpack.c.b16 %v882, %v877
        %v1023 = vpack.c.b16 %v883, %v878
        %v1024 = vpack.c.b16 %v884, %v879
        %v1025 = vpack.c.b16 %v885, %v880
        %v1026 = vpack.c.b16 %v886, %v881
        %v1027 = vpack.c.b16 %v892, %v887
        %v1028 = vpack.c.b16 %v893, %v888
        %v1029 = vpack.c.b16 %v894, %v889
        %v1030 = vpack.c.b16 %v895, %v890
        %v1031 = vpack.c.b16 %v896, %v891
        %v1032 = vpack.c.b16 %v902, %v897
        %v1033 = vpack.c.b16 %v903, %v898
        %v1034 = vpack.c.b16 %v904, %v899
        %v1035 = vpack.c.b16 %v905, %v900
        %v1036 = vpack.c.b16 %v906, %v901
        %v1037 = vpack.c.b16 %v912, %v907
        %v1038 = vpack.c.b16 %v913, %v908
        %v1039 = vpack.c.b16 %v914, %v909
        %v1040 = vpack.c.b16 %v915, %v910
        %v1041 = vpack.c.b16 %v916, %v911
        %v1042 = vpack.c.b16 %v922, %v917
        %v1043 = vpack.c.b16 %v923, %v918
        %v1044 = vpack.c.b16 %v924, %v919
        %v1045 = vpack.c.b16 %v925, %v920
        %v1046 = vpack.c.b16 %v926, %v921
        %v1047 = vpack.c.b16 %v932, %v927
        %v1048 = vpack.c.b16 %v933, %v928
        %v1049 = vpack.c.b16 %v934, %v929
        %v1050 = vpack.c.b16 %v935, %v930
        %v1051 = vpack.c.b16 %v936, %v931
        %v1052 = vpack.c.b16 %v942, %v937
        %v1053 = vpack.c.b16 %v943, %v938
        %v1054 = vpack.c.b16 %v944, %v939
        %v1055 = vpack.c.b16 %v945, %v940
        %v1056 = vpack.c.b16 %v946, %v941
        %v1057 = vpack.c.b16 %v952, %v947
        %v1058 = vpack.c.b16 %v953, %v948
        %v1059 = vpack.c.b16 %v954, %v949
        %v1060 = vpack.c.b16 %v955, %v950
        %v1061 = vpack.c.b16 %v956, %v951
        %v1062 = vpack.c.b16 %v962, %v957
        %v1063 = vpack.c.b16 %v963, %v958
        %v1064 = vpack.c.b16 %v964, %v959
        %v1065 = vpack.c.b16 %v965, %v960
        %v1066 = vpack.c.b16 %v966, %v961
        %v1067 = vpack.c.b16 %v972, %v967
        %v1068 = vpack.c.b16 %v973, %v968
        %v1069 = vpack.c.b16 %v974, %v969
        %v1070 = vpack.c.b16 %v975, %v970
        %v1071 = vpack.c.b16 %v976, %v971
        %v1072 = vpack.c.b16 %v982, %v977
        %v1073 = vpack.c.b16 %v983, %v978
        %v1074 = vpack.c.b16 %v984, %v979
        %v1075 = vpack.c.b16 %v985, %v980
        %v1076 = vpack.c.b16 %v986, %v981
        %v1077 = vpack.c.b16 %v992, %v987
        %v1078 = vpack.c.b16 %v993, %v988
        %v1079 = vpack.c.b16 %v994, %v989
        %v1080 = vpack.c.b16 %v995, %v990
        %v1081 = vpack.c.b16 %v996, %v991
        %v1082 = vpack.c.b16 %v1002, %v997
        %v1083 = vpack.c.b16 %v1003, %v998
        %v1084 = vpack.c.b16 %v1004, %v999
        %v1085 = vpack.c.b16 %v1005, %v1000
        %v1086 = vpack.c.b16 %v1006, %v1001
        %v1247 = vunpack.c.l.b16 %v671
        %v1248 = vunpack.c.h.b16 %v671
        %v1249 = vunpack.c.l.b16 %v672
        %v1250 = vunpack.c.h.b16 %v672
        %v1251 = vunpack.c.l.b16 %v673
        %v1252 = vunpack.c.h.b16 %v673
        %v1253 = vunpack.c.l.b16 %v674
        %v1254 = vunpack.c.h.b16 %v674
        %v1255 = vunpack.c.l.b16 %v675
        %v1256 = vunpack.c.h.b16 %v675
        %v1257 = vunpack.c.l.b16 %v676
        %v1258 = vunpack.c.h.b16 %v676
        %v1259 = vunpack.c.l.b16 %v677
        %v1260 = vunpack.c.h.b16 %v677
        %v1261 = vunpack.c.l.b16 %v678
        %v1262 = vunpack.c.h.b16 %v678
        %v1263 = vunpack.c.l.b16 %v679
        %v1264 = vunpack.c.h.b16 %v679
        %v1265 = vunpack.c.l.b16 %v680
        %v1266 = vunpack.c.h.b16 %v680
        %v1267 = vunpack.c.l.b16 %v681
        %v1268 = vunpack.c.h.b16 %v681
        %v1269 = vunpack.c.l.b16 %v682
        %v1270 = vunpack.c.h.b16 %v682
        %v1271 = vunpack.c.l.b16 %v683
        %v1272 = vunpack.c.h.b16 %v683
        %v1273 = vunpack.c.l.b16 %v684
        %v1274 = vunpack.c.h.b16 %v684
        %v1275 = vunpack.c.l.b16 %v685
        %v1276 = vunpack.c.h.b16 %v685
        %v1277 = vunpack.c.l.b16 %v686
        %v1278 = vunpack.c.h.b16 %v686
        %v1279 = vunpack.c.l.b16 %v687
        %v1280 = vunpack.c.h.b16 %v687
        %v1281 = vunpack.c.l.b16 %v688
        %v1282 = vunpack.c.h.b16 %v688
        %v1283 = vunpack.c.l.b16 %v689
        %v1284 = vunpack.c.h.b16 %v689
        %v1285 = vunpack.c.l.b16 %v690
        %v1286 = vunpack.c.h.b16 %v690
        %v1287 = vunpack.c.l.b16 %v691
        %v1288 = vunpack.c.h.b16 %v691
        %v1289 = vunpack.c.l.b16 %v692
        %v1290 = vunpack.c.h.b16 %v692
        %v1291 = vunpack.c.l.b16 %v693
        %v1292 = vunpack.c.h.b16 %v693
        %v1293 = vunpack.c.l.b16 %v694
        %v1294 = vunpack.c.h.b16 %v694
        %v1295 = vunpack.c.l.b16 %v695
        %v1296 = vunpack.c.h.b16 %v695
        %v1297 = vunpack.c.l.b16 %v696
        %v1298 = vunpack.c.h.b16 %v696
        %v1299 = vunpack.c.l.b16 %v697
        %v1300 = vunpack.c.h.b16 %v697
        %v1301 = vunpack.c.l.b16 %v698
        %v1302 = vunpack.c.h.b16 %v698
        %v1303 = vunpack.c.l.b16 %v699
        %v1304 = vunpack.c.h.b16 %v699
        %v1305 = vunpack.c.l.b16 %v700
        %v1306 = vunpack.c.h.b16 %v700
        %v1307 = vunpack.c.l.b16 %v701
        %v1308 = vunpack.c.h.b16 %v701
        %v1309 = vunpack.c.l.b16 %v702
        %v1310 = vunpack.c.h.b16 %v702
        %v1311 = vunpack.c.l.b16 %v703
        %v1312 = vunpack.c.h.b16 %v703
        %v1313 = vunpack.c.l.b16 %v704
        %v1314 = vunpack.c.h.b16 %v704
        %v1315 = vunpack.c.l.b16 %v705
        %v1316 = vunpack.c.h.b16 %v705
        %v1317 = vunpack.c.l.b16 %v706
        %v1318 = vunpack.c.h.b16 %v706
        %v1319 = vunpack.c.l.b16 %v707
        %v1320 = vunpack.c.h.b16 %v707
        %v1321 = vunpack.c.l.b16 %v708
        %v1322 = vunpack.c.h.b16 %v708
        %v1323 = vunpack.c.l.b16 %v709
        %v1324 = vunpack.c.h.b16 %v709
        %v1325 = vunpack.c.l.b16 %v710
        %v1326 = vunpack.c.h.b16 %v710
        %v1327 = vunpack.c.l.b16 %v711
        %v1328 = vunpack.c.h.b16 %v711
        %v1329 = vunpack.c.l.b16 %v712
        %v1330 = vunpack.c.h.b16 %v712
        %v1331 = vunpack.c.l.b16 %v713
        %v1332 = vunpack.c.h.b16 %v713
        %v1333 = vunpack.c.l.b16 %v714
        %v1334 = vunpack.c.h.b16 %v714
        %v1335 = vunpack.c.l.b16 %v715
        %v1336 = vunpack.c.h.b16 %v715
        %v1337 = vunpack.c.l.b16 %v716
        %v1338 = vunpack.c.h.b16 %v716
        %v1339 = vunpack.c.l.b16 %v717
        %v1340 = vunpack.c.h.b16 %v717
        %v1341 = vunpack.c.l.b16 %v718
        %v1342 = vunpack.c.h.b16 %v718
        %v1343 = vunpack.c.l.b16 %v719
        %v1344 = vunpack.c.h.b16 %v719
        %v1345 = vunpack.c.l.b16 %v720
        %v1346 = vunpack.c.h.b16 %v720
        %v1347 = vunpack.c.l.b16 %v721
        %v1348 = vunpack.c.h.b16 %v721
        %v1349 = vunpack.c.l.b16 %v722
        %v1350 = vunpack.c.h.b16 %v722
        %v1351 = vunpack.c.l.b16 %v723
        %v1352 = vunpack.c.h.b16 %v723
        %v1353 = vunpack.c.l.b16 %v724
        %v1354 = vunpack.c.h.b16 %v724
        %v1355 = vunpack.c.l.b16 %v725
        %v1356 = vunpack.c.h.b16 %v725
        %v1357 = vunpack.c.l.b16 %v726
        %v1358 = vunpack.c.h.b16 %v726
        %v1359 = vunpack.c.l.b16 %v727
        %v1360 = vunpack.c.h.b16 %v727
        %v1361 = vunpack.c.l.b16 %v728
        %v1362 = vunpack.c.h.b16 %v728
        %v1363 = vunpack.c.l.b16 %v729
        %v1364 = vunpack.c.h.b16 %v729
        %v1365 = vunpack.c.l.b16 %v730
        %v1366 = vunpack.c.h.b16 %v730
        %v1367 = vunpack.c.l.b16 %v731
        %v1368 = vunpack.c.h.b16 %v731
        %v1369 = vunpack.c.l.b16 %v732
        %v1370 = vunpack.c.h.b16 %v732
        %v1371 = vunpack.c.l.b16 %v733
        %v1372 = vunpack.c.h.b16 %v733
        %v1373 = vunpack.c.l.b16 %v734
        %v1374 = vunpack.c.h.b16 %v734
        %v1375 = vunpack.c.l.b16 %v735
        %v1376 = vunpack.c.h.b16 %v735
        %v1377 = vunpack.c.l.b16 %v736
        %v1378 = vunpack.c.h.b16 %v736
        %v1379 = vunpack.c.l.b16 %v737
        %v1380 = vunpack.c.h.b16 %v737
        %v1381 = vunpack.c.l.b16 %v738
        %v1382 = vunpack.c.h.b16 %v738
        %v1383 = vunpack.c.l.b16 %v739
        %v1384 = vunpack.c.h.b16 %v739
        %v1385 = vunpack.c.l.b16 %v740
        %v1386 = vunpack.c.h.b16 %v740
        %v1387 = vunpack.c.l.b16 %v741
        %v1388 = vunpack.c.h.b16 %v741
        %v1389 = vunpack.c.l.b16 %v742
        %v1390 = vunpack.c.h.b16 %v742
        %v1391 = vunpack.c.l.b16 %v743
        %v1392 = vunpack.c.h.b16 %v743
        %v1393 = vunpack.c.l.b16 %v744
        %v1394 = vunpack.c.h.b16 %v744
        %v1395 = vunpack.c.l.b16 %v745
        %v1396 = vunpack.c.h.b16 %v745
        %v1397 = vunpack.c.l.b16 %v746
        %v1398 = vunpack.c.h.b16 %v746
        %v1399 = vunpack.c.l.b16 %v747
        %v1400 = vunpack.c.h.b16 %v747
        %v1401 = vunpack.c.l.b16 %v748
        %v1402 = vunpack.c.h.b16 %v748
        %v1403 = vunpack.c.l.b16 %v749
        %v1404 = vunpack.c.h.b16 %v749
        %v1405 = vunpack.c.l.b16 %v750
        %v1406 = vunpack.c.h.b16 %v750
        %v1407 = vpack.c.b16 %v1249, %v1247
        %v1408 = vpack.c.b16 %v1250, %v1248
        %v1409 = vpack.c.b16 %v1253, %v1251
        %v1410 = vpack.c.b16 %v1254, %v1252
        %v1411 = vpack.c.b16 %v1257, %v1255
        %v1412 = vpack.c.b16 %v1258, %v1256
        %v1413 = vpack.c.b16 %v1261, %v1259
        %v1414 = vpack.c.b16 %v1262, %v1260
        %v1415 = vpack.c.b16 %v1265, %v1263
        %v1416 = vpack.c.b16 %v1266, %v1264
        %v1417 = vpack.c.b16 %v1269, %v1267
        %v1418 = vpack.c.b16 %v1270, %v1268
        %v1419 = vpack.c.b16 %v1273, %v1271
        %v1420 = vpack.c.b16 %v1274, %v1272
        %v1421 = vpack.c.b16 %v1277, %v1275
        %v1422 = vpack.c.b16 %v1278, %v1276
        %v1423 = vpack.c.b16 %v1281, %v1279
        %v1424 = vpack.c.b16 %v1282, %v1280
        %v1425 = vpack.c.b16 %v1285, %v1283
        %v1426 = vpack.c.b16 %v1286, %v1284
        %v1427 = vpack.c.b16 %v1289, %v1287
        %v1428 = vpack.c.b16 %v1290, %v1288
        %v1429 = vpack.c.b16 %v1293, %v1291
        %v1430 = vpack.c.b16 %v1294, %v1292
        %v1431 = vpack.c.b16 %v1297, %v1295
        %v1432 = vpack.c.b16 %v1298, %v1296
        %v1433 = vpack.c.b16 %v1301, %v1299
        %v1434 = vpack.c.b16 %v1302, %v1300
        %v1435 = vpack.c.b16 %v1305, %v1303
        %v1436 = vpack.c.b16 %v1306, %v1304
        %v1437 = vpack.c.b16 %v1309, %v1307
        %v1438 = vpack.c.b16 %v1310, %v1308
        %v1439 = vpack.c.b16 %v1313, %v1311
        %v1440 = vpack.c.b16 %v1314, %v1312
        %v1441 = vpack.c.b16 %v1317, %v1315
        %v1442 = vpack.c.b16 %v1318, %v1316
        %v1443 = vpack.c.b16 %v1321, %v1319
        %v1444 = vpack.c.b16 %v1322, %v1320
        %v1445 = vpack.c.b16 %v1325, %v1323
        %v1446 = vpack.c.b16 %v1326, %v1324
        %v1447 = vpack.c.b16 %v1329, %v1327
        %v1448 = vpack.c.b16 %v1330, %v1328
        %v1449 = vpack.c.b16 %v1333, %v1331
        %v1450 = vpack.c.b16 %v1334, %v1332
        %v1451 = vpack.c.b16 %v1337, %v1335
        %v1452 = vpack.c.b16 %v1338, %v1336
        %v1453 = vpack.c.b16 %v1341, %v1339
        %v1454 = vpack.c.b16 %v1342, %v1340
        %v1455 = vpack.c.b16 %v1345, %v1343
        %v1456 = vpack.c.b16 %v1346, %v1344
        %v1457 = vpack.c.b16 %v1349, %v1347
        %v1458 = vpack.c.b16 %v1350, %v1348
        %v1459 = vpack.c.b16 %v1353, %v1351
        %v1460 = vpack.c.b16 %v1354, %v1352
        %v1461 = vpack.c.b16 %v1357, %v1355
        %v1462 = vpack.c.b16 %v1358, %v1356
        %v1463 = vpack.c.b16 %v1361, %v1359
        %v1464 = vpack.c.b16 %v1362, %v1360
        %v1465 = vpack.c.b16 %v1365, %v1363
        %v1466 = vpack.c.b16 %v1366, %v1364
        %v1467 = vpack.c.b16 %v1369, %v1367
        %v1468 = vpack.c.b16 %v1370, %v1368
        %v1469 = vpack.c.b16 %v1373, %v1371
        %v1470 = vpack.c.b16 %v1374, %v1372
        %v1471 = vpack.c.b16 %v1377, %v1375
        %v1472 = vpack.c.b16 %v1378, %v1376
        %v1473 = vpack.c.b16 %v1381, %v1379
        %v1474 = vpack.c.b16 %v1382, %v1380
        %v1475 = vpack.c.b16 %v1385, %v1383
        %v1476 = vpack.c.b16 %v1386, %v1384
        %v1477 = vpack.c.b16 %v1389, %v1387
        %v1478 = vpack.c.b16 %v1390, %v1388
        %v1479 = vpack.c.b16 %v1393, %v1391
        %v1480 = vpack.c.b16 %v1394, %v1392
        %v1481 = vpack.c.b16 %v1397, %v1395
        %v1482 = vpack.c.b16 %v1398, %v1396
        %v1483 = vpack.c.b16 %v1401, %v1399
        %v1484 = vpack.c.b16 %v1402, %v1400
        %v1485 = vpack.c.b16 %v1405, %v1403
        %v1486 = vpack.c.b16 %v1406, %v1404
        %1567 = vmatpush.bf16.msra.mxu0 %v1421
        %1568 = vmatpush.bf16.msra.mxu0 %v1419
        %1569 = vmatpush.bf16.msra.mxu0 %v1417
        %1570 = vmatpush.bf16.msra.mxu0 %v1415
        %1571 = vmatpush.bf16.msra.mxu0 %v1413
        %1572 = vmatpush.bf16.msra.mxu0 %v1411
        %1573 = vmatpush.bf16.msra.mxu0 %v1409
        %1574 = vmatpush.bf16.msra.mxu0 %v1407
        %1575 = vmatmul.bf16.gmra.mxu0 %v1007
        %v1576 = vpop.f32.mrf.mxu0
        %v1577 = vadd.f32 0.0, %v1576
        %v1578 = vpop.f32.mrf.mxu0
        %v1579 = vadd.f32 0.0, %v1578
        %1580 = vmatmul.bf16.gmra.mxu0 %v1012
        %v1581 = vpop.f32.mrf.mxu0
        %v1582 = vadd.f32 0.0, %v1581
        %v1583 = vpop.f32.mrf.mxu0
        %v1584 = vadd.f32 0.0, %v1583
        %1585 = vmatmul.bf16.gmra.mxu0 %v1017
        %v1586 = vpop.f32.mrf.mxu0
        %v1587 = vadd.f32 0.0, %v1586
        %v1588 = vpop.f32.mrf.mxu0
        %v1589 = vadd.f32 0.0, %v1588
        %1590 = vmatmul.bf16.gmra.mxu0 %v1022
        %v1591 = vpop.f32.mrf.mxu0
        %v1592 = vadd.f32 0.0, %v1591
        %v1593 = vpop.f32.mrf.mxu0
        %v1594 = vadd.f32 0.0, %v1593
        %1595 = vmatmul.bf16.gmra.mxu0 %v1027
        %v1596 = vpop.f32.mrf.mxu0
        %v1597 = vadd.f32 0.0, %v1596
        %v1598 = vpop.f32.mrf.mxu0
        %v1599 = vadd.f32 0.0, %v1598
        %1600 = vmatmul.bf16.gmra.mxu0 %v1032
        %v1601 = vpop.f32.mrf.mxu0
        %v1602 = vadd.f32 0.0, %v1601
        %v1603 = vpop.f32.mrf.mxu0
        %v1604 = vadd.f32 0.0, %v1603
        %1605 = vmatmul.bf16.gmra.mxu0 %v1037
        %v1606 = vpop.f32.mrf.mxu0
        %v1607 = vadd.f32 0.0, %v1606
        %v1608 = vpop.f32.mrf.mxu0
        %v1609 = vadd.f32 0.0, %v1608
        %1610 = vmatmul.bf16.gmra.mxu0 %v1042
        %v1611 = vpop.f32.mrf.mxu0
        %v1612 = vadd.f32 0.0, %v1611
        %v1613 = vpop.f32.mrf.mxu0
        %v1614 = vadd.f32 0.0, %v1613
        %1615 = vmatmul.bf16.gmra.mxu0 %v1047
        %v1616 = vpop.f32.mrf.mxu0
        %v1617 = vadd.f32 0.0, %v1616
        %v1618 = vpop.f32.mrf.mxu0
        %v1619 = vadd.f32 0.0, %v1618
        %1620 = vmatmul.bf16.gmra.mxu0 %v1052
        %v1621 = vpop.f32.mrf.mxu0
        %v1622 = vadd.f32 0.0, %v1621
        %v1623 = vpop.f32.mrf.mxu0
        %v1624 = vadd.f32 0.0, %v1623
        %1625 = vmatmul.bf16.gmra.mxu0 %v1057
        %v1626 = vpop.f32.mrf.mxu0
        %v1627 = vadd.f32 0.0, %v1626
        %v1628 = vpop.f32.mrf.mxu0
        %v1629 = vadd.f32 0.0, %v1628
        %1630 = vmatmul.bf16.gmra.mxu0 %v1062
        %v1631 = vpop.f32.mrf.mxu0
        %v1632 = vadd.f32 0.0, %v1631
        %v1633 = vpop.f32.mrf.mxu0
        %v1634 = vadd.f32 0.0, %v1633
        %1635 = vmatmul.bf16.gmra.mxu0 %v1067
        %v1636 = vpop.f32.mrf.mxu0
        %v1637 = vadd.f32 0.0, %v1636
        %v1638 = vpop.f32.mrf.mxu0
        %v1639 = vadd.f32 0.0, %v1638
        %1640 = vmatmul.bf16.gmra.mxu0 %v1072
        %v1641 = vpop.f32.mrf.mxu0
        %v1642 = vadd.f32 0.0, %v1641
        %v1643 = vpop.f32.mrf.mxu0
        %v1644 = vadd.f32 0.0, %v1643
        %1645 = vmatmul.bf16.gmra.mxu0 %v1077
        %v1646 = vpop.f32.mrf.mxu0
        %v1647 = vadd.f32 0.0, %v1646
        %v1648 = vpop.f32.mrf.mxu0
        %v1649 = vadd.f32 0.0, %v1648
        %1650 = vmatmul.bf16.gmra.mxu0 %v1082
        %v1651 = vpop.f32.mrf.mxu0
        %v1652 = vadd.f32 0.0, %v1651
        %v1653 = vpop.f32.mrf.mxu0
        %v1654 = vadd.f32 0.0, %v1653
        %1655 = vdwg.mxu0
        %1656 = vmatpush.bf16.msra.mxu0 %v1437
        %1657 = vmatpush.bf16.msra.mxu0 %v1435
        %1658 = vmatpush.bf16.msra.mxu0 %v1433
        %1659 = vmatpush.bf16.msra.mxu0 %v1431
        %1660 = vmatpush.bf16.msra.mxu0 %v1429
        %1661 = vmatpush.bf16.msra.mxu0 %v1427
        %1662 = vmatpush.bf16.msra.mxu0 %v1425
        %1663 = vmatpush.bf16.msra.mxu0 %v1423
        %1664 = vmatmul.bf16.gmra.mxu0 %v1008
        %v1665 = vpop.f32.mrf.mxu0
        %v1666 = vadd.f32 %v1577, %v1665
        %v1667 = vpop.f32.mrf.mxu0
        %v1668 = vadd.f32 %v1579, %v1667
        %1669 = vmatmul.bf16.gmra.mxu0 %v1013
        %v1670 = vpop.f32.mrf.mxu0
        %v1671 = vadd.f32 %v1582, %v1670
        %v1672 = vpop.f32.mrf.mxu0
        %v1673 = vadd.f32 %v1584, %v1672
        %1674 = vmatmul.bf16.gmra.mxu0 %v1018
        %v1675 = vpop.f32.mrf.mxu0
        %v1676 = vadd.f32 %v1587, %v1675
        %v1677 = vpop.f32.mrf.mxu0
        %v1678 = vadd.f32 %v1589, %v1677
        %1679 = vmatmul.bf16.gmra.mxu0 %v1023
        %v1680 = vpop.f32.mrf.mxu0
        %v1681 = vadd.f32 %v1592, %v1680
        %v1682 = vpop.f32.mrf.mxu0
        %v1683 = vadd.f32 %v1594, %v1682
        %1684 = vmatmul.bf16.gmra.mxu0 %v1028
        %v1685 = vpop.f32.mrf.mxu0
        %v1686 = vadd.f32 %v1597, %v1685
        %v1687 = vpop.f32.mrf.mxu0
        %v1688 = vadd.f32 %v1599, %v1687
        %1689 = vmatmul.bf16.gmra.mxu0 %v1033
        %v1690 = vpop.f32.mrf.mxu0
        %v1691 = vadd.f32 %v1602, %v1690
        %v1692 = vpop.f32.mrf.mxu0
        %v1693 = vadd.f32 %v1604, %v1692
        %1694 = vmatmul.bf16.gmra.mxu0 %v1038
        %v1695 = vpop.f32.mrf.mxu0
        %v1696 = vadd.f32 %v1607, %v1695
        %v1697 = vpop.f32.mrf.mxu0
        %v1698 = vadd.f32 %v1609, %v1697
        %1699 = vmatmul.bf16.gmra.mxu0 %v1043
        %v1700 = vpop.f32.mrf.mxu0
        %v1701 = vadd.f32 %v1612, %v1700
        %v1702 = vpop.f32.mrf.mxu0
        %v1703 = vadd.f32 %v1614, %v1702
        %1704 = vmatmul.bf16.gmra.mxu0 %v1048
        %v1705 = vpop.f32.mrf.mxu0
        %v1706 = vadd.f32 %v1617, %v1705
        %v1707 = vpop.f32.mrf.mxu0
        %v1708 = vadd.f32 %v1619, %v1707
        %1709 = vmatmul.bf16.gmra.mxu0 %v1053
        %v1710 = vpop.f32.mrf.mxu0
        %v1711 = vadd.f32 %v1622, %v1710
        %v1712 = vpop.f32.mrf.mxu0
        %v1713 = vadd.f32 %v1624, %v1712
        %1714 = vmatmul.bf16.gmra.mxu0 %v1058
        %v1715 = vpop.f32.mrf.mxu0
        %v1716 = vadd.f32 %v1627, %v1715
        %v1717 = vpop.f32.mrf.mxu0
        %v1718 = vadd.f32 %v1629, %v1717
        %1719 = vmatmul.bf16.gmra.mxu0 %v1063
        %v1720 = vpop.f32.mrf.mxu0
        %v1721 = vadd.f32 %v1632, %v1720
        %v1722 = vpop.f32.mrf.mxu0
        %v1723 = vadd.f32 %v1634, %v1722
        %1724 = vmatmul.bf16.gmra.mxu0 %v1068
        %v1725 = vpop.f32.mrf.mxu0
        %v1726 = vadd.f32 %v1637, %v1725
        %v1727 = vpop.f32.mrf.mxu0
        %v1728 = vadd.f32 %v1639, %v1727
        %1729 = vmatmul.bf16.gmra.mxu0 %v1073
        %v1730 = vpop.f32.mrf.mxu0
        %v1731 = vadd.f32 %v1642, %v1730
        %v1732 = vpop.f32.mrf.mxu0
        %v1733 = vadd.f32 %v1644, %v1732
        %1734 = vmatmul.bf16.gmra.mxu0 %v1078
        %v1735 = vpop.f32.mrf.mxu0
        %v1736 = vadd.f32 %v1647, %v1735
        %v1737 = vpop.f32.mrf.mxu0
        %v1738 = vadd.f32 %v1649, %v1737
        %1739 = vmatmul.bf16.gmra.mxu0 %v1083
        %v1740 = vpop.f32.mrf.mxu0
        %v1741 = vadd.f32 %v1652, %v1740
        %v1742 = vpop.f32.mrf.mxu0
        %v1743 = vadd.f32 %v1654, %v1742
        %1744 = vdwg.mxu0
        %1745 = vmatpush.bf16.msra.mxu0 %v1453
        %1746 = vmatpush.bf16.msra.mxu0 %v1451
        %1747 = vmatpush.bf16.msra.mxu0 %v1449
        %1748 = vmatpush.bf16.msra.mxu0 %v1447
        %1749 = vmatpush.bf16.msra.mxu0 %v1445
        %1750 = vmatpush.bf16.msra.mxu0 %v1443
        %1751 = vmatpush.bf16.msra.mxu0 %v1441
        %1752 = vmatpush.bf16.msra.mxu0 %v1439
        %1753 = vmatmul.bf16.gmra.mxu0 %v1009
        %v1754 = vpop.f32.mrf.mxu0
        %v1755 = vadd.f32 %v1666, %v1754
        %v1756 = vpop.f32.mrf.mxu0
        %v1757 = vadd.f32 %v1668, %v1756
        %1758 = vmatmul.bf16.gmra.mxu0 %v1014
        %v1759 = vpop.f32.mrf.mxu0
        %v1760 = vadd.f32 %v1671, %v1759
        %v1761 = vpop.f32.mrf.mxu0
        %v1762 = vadd.f32 %v1673, %v1761
        %1763 = vmatmul.bf16.gmra.mxu0 %v1019
        %v1764 = vpop.f32.mrf.mxu0
        %v1765 = vadd.f32 %v1676, %v1764
        %v1766 = vpop.f32.mrf.mxu0
        %v1767 = vadd.f32 %v1678, %v1766
        %1768 = vmatmul.bf16.gmra.mxu0 %v1024
        %v1769 = vpop.f32.mrf.mxu0
        %v1770 = vadd.f32 %v1681, %v1769
        %v1771 = vpop.f32.mrf.mxu0
        %v1772 = vadd.f32 %v1683, %v1771
        %1773 = vmatmul.bf16.gmra.mxu0 %v1029
        %v1774 = vpop.f32.mrf.mxu0
        %v1775 = vadd.f32 %v1686, %v1774
        %v1776 = vpop.f32.mrf.mxu0
        %v1777 = vadd.f32 %v1688, %v1776
        %1778 = vmatmul.bf16.gmra.mxu0 %v1034
        %v1779 = vpop.f32.mrf.mxu0
        %v1780 = vadd.f32 %v1691, %v1779
        %v1781 = vpop.f32.mrf.mxu0
        %v1782 = vadd.f32 %v1693, %v1781
        %1783 = vmatmul.bf16.gmra.mxu0 %v1039
        %v1784 = vpop.f32.mrf.mxu0
        %v1785 = vadd.f32 %v1696, %v1784
        %v1786 = vpop.f32.mrf.mxu0
        %v1787 = vadd.f32 %v1698, %v1786
        %1788 = vmatmul.bf16.gmra.mxu0 %v1044
        %v1789 = vpop.f32.mrf.mxu0
        %v1790 = vadd.f32 %v1701, %v1789
        %v1791 = vpop.f32.mrf.mxu0
        %v1792 = vadd.f32 %v1703, %v1791
        %1793 = vmatmul.bf16.gmra.mxu0 %v1049
        %v1794 = vpop.f32.mrf.mxu0
        %v1795 = vadd.f32 %v1706, %v1794
        %v1796 = vpop.f32.mrf.mxu0
        %v1797 = vadd.f32 %v1708, %v1796
        %1798 = vmatmul.bf16.gmra.mxu0 %v1054
        %v1799 = vpop.f32.mrf.mxu0
        %v1800 = vadd.f32 %v1711, %v1799
        %v1801 = vpop.f32.mrf.mxu0
        %v1802 = vadd.f32 %v1713, %v1801
        %1803 = vmatmul.bf16.gmra.mxu0 %v1059
        %v1804 = vpop.f32.mrf.mxu0
        %v1805 = vadd.f32 %v1716, %v1804
        %v1806 = vpop.f32.mrf.mxu0
        %v1807 = vadd.f32 %v1718, %v1806
        %1808 = vmatmul.bf16.gmra.mxu0 %v1064
        %v1809 = vpop.f32.mrf.mxu0
        %v1810 = vadd.f32 %v1721, %v1809
        %v1811 = vpop.f32.mrf.mxu0
        %v1812 = vadd.f32 %v1723, %v1811
        %1813 = vmatmul.bf16.gmra.mxu0 %v1069
        %v1814 = vpop.f32.mrf.mxu0
        %v1815 = vadd.f32 %v1726, %v1814
        %v1816 = vpop.f32.mrf.mxu0
        %v1817 = vadd.f32 %v1728, %v1816
        %1818 = vmatmul.bf16.gmra.mxu0 %v1074
        %v1819 = vpop.f32.mrf.mxu0
        %v1820 = vadd.f32 %v1731, %v1819
        %v1821 = vpop.f32.mrf.mxu0
        %v1822 = vadd.f32 %v1733, %v1821
        %1823 = vmatmul.bf16.gmra.mxu0 %v1079
        %v1824 = vpop.f32.mrf.mxu0
        %v1825 = vadd.f32 %v1736, %v1824
        %v1826 = vpop.f32.mrf.mxu0
        %v1827 = vadd.f32 %v1738, %v1826
        %1828 = vmatmul.bf16.gmra.mxu0 %v1084
        %v1829 = vpop.f32.mrf.mxu0
        %v1830 = vadd.f32 %v1741, %v1829
        %v1831 = vpop.f32.mrf.mxu0
        %v1832 = vadd.f32 %v1743, %v1831
        %1833 = vdwg.mxu0
        %1834 = vmatpush.bf16.msra.mxu0 %v1469
        %1835 = vmatpush.bf16.msra.mxu0 %v1467
        %1836 = vmatpush.bf16.msra.mxu0 %v1465
        %1837 = vmatpush.bf16.msra.mxu0 %v1463
        %1838 = vmatpush.bf16.msra.mxu0 %v1461
        %1839 = vmatpush.bf16.msra.mxu0 %v1459
        %1840 = vmatpush.bf16.msra.mxu0 %v1457
        %1841 = vmatpush.bf16.msra.mxu0 %v1455
        %1842 = vmatmul.bf16.gmra.mxu0 %v1010
        %v1843 = vpop.f32.mrf.mxu0
        %v1844 = vadd.f32 %v1755, %v1843
        %v1845 = vpop.f32.mrf.mxu0
        %v1846 = vadd.f32 %v1757, %v1845
        %1847 = vmatmul.bf16.gmra.mxu0 %v1015
        %v1848 = vpop.f32.mrf.mxu0
        %v1849 = vadd.f32 %v1760, %v1848
        %v1850 = vpop.f32.mrf.mxu0
        %v1851 = vadd.f32 %v1762, %v1850
        %1852 = vmatmul.bf16.gmra.mxu0 %v1020
        %v1853 = vpop.f32.mrf.mxu0
        %v1854 = vadd.f32 %v1765, %v1853
        %v1855 = vpop.f32.mrf.mxu0
        %v1856 = vadd.f32 %v1767, %v1855
        %1857 = vmatmul.bf16.gmra.mxu0 %v1025
        %v1858 = vpop.f32.mrf.mxu0
        %v1859 = vadd.f32 %v1770, %v1858
        %v1860 = vpop.f32.mrf.mxu0
        %v1861 = vadd.f32 %v1772, %v1860
        %1862 = vmatmul.bf16.gmra.mxu0 %v1030
        %v1863 = vpop.f32.mrf.mxu0
        %v1864 = vadd.f32 %v1775, %v1863
        %v1865 = vpop.f32.mrf.mxu0
        %v1866 = vadd.f32 %v1777, %v1865
        %1867 = vmatmul.bf16.gmra.mxu0 %v1035
        %v1868 = vpop.f32.mrf.mxu0
        %v1869 = vadd.f32 %v1780, %v1868
        %v1870 = vpop.f32.mrf.mxu0
        %v1871 = vadd.f32 %v1782, %v1870
        %1872 = vmatmul.bf16.gmra.mxu0 %v1040
        %v1873 = vpop.f32.mrf.mxu0
        %v1874 = vadd.f32 %v1785, %v1873
        %v1875 = vpop.f32.mrf.mxu0
        %v1876 = vadd.f32 %v1787, %v1875
        %1877 = vmatmul.bf16.gmra.mxu0 %v1045
        %v1878 = vpop.f32.mrf.mxu0
        %v1879 = vadd.f32 %v1790, %v1878
        %v1880 = vpop.f32.mrf.mxu0
        %v1881 = vadd.f32 %v1792, %v1880
        %1882 = vmatmul.bf16.gmra.mxu0 %v1050
        %v1883 = vpop.f32.mrf.mxu0
        %v1884 = vadd.f32 %v1795, %v1883
        %v1885 = vpop.f32.mrf.mxu0
        %v1886 = vadd.f32 %v1797, %v1885
        %1887 = vmatmul.bf16.gmra.mxu0 %v1055
        %v1888 = vpop.f32.mrf.mxu0
        %v1889 = vadd.f32 %v1800, %v1888
        %v1890 = vpop.f32.mrf.mxu0
        %v1891 = vadd.f32 %v1802, %v1890
        %1892 = vmatmul.bf16.gmra.mxu0 %v1060
        %v1893 = vpop.f32.mrf.mxu0
        %v1894 = vadd.f32 %v1805, %v1893
        %v1895 = vpop.f32.mrf.mxu0
        %v1896 = vadd.f32 %v1807, %v1895
        %1897 = vmatmul.bf16.gmra.mxu0 %v1065
        %v1898 = vpop.f32.mrf.mxu0
        %v1899 = vadd.f32 %v1810, %v1898
        %v1900 = vpop.f32.mrf.mxu0
        %v1901 = vadd.f32 %v1812, %v1900
        %1902 = vmatmul.bf16.gmra.mxu0 %v1070
        %v1903 = vpop.f32.mrf.mxu0
        %v1904 = vadd.f32 %v1815, %v1903
        %v1905 = vpop.f32.mrf.mxu0
        %v1906 = vadd.f32 %v1817, %v1905
        %1907 = vmatmul.bf16.gmra.mxu0 %v1075
        %v1908 = vpop.f32.mrf.mxu0
        %v1909 = vadd.f32 %v1820, %v1908
        %v1910 = vpop.f32.mrf.mxu0
        %v1911 = vadd.f32 %v1822, %v1910
        %1912 = vmatmul.bf16.gmra.mxu0 %v1080
        %v1913 = vpop.f32.mrf.mxu0
        %v1914 = vadd.f32 %v1825, %v1913
        %v1915 = vpop.f32.mrf.mxu0
        %v1916 = vadd.f32 %v1827, %v1915
        %1917 = vmatmul.bf16.gmra.mxu0 %v1085
        %v1918 = vpop.f32.mrf.mxu0
        %v1919 = vadd.f32 %v1830, %v1918
        %v1920 = vpop.f32.mrf.mxu0
        %v1921 = vadd.f32 %v1832, %v1920
        %1922 = vdwg.mxu0
        %1923 = vmatpush.bf16.msra.mxu0 %v1485
        %1924 = vmatpush.bf16.msra.mxu0 %v1483
        %1925 = vmatpush.bf16.msra.mxu0 %v1481
        %1926 = vmatpush.bf16.msra.mxu0 %v1479
        %1927 = vmatpush.bf16.msra.mxu0 %v1477
        %1928 = vmatpush.bf16.msra.mxu0 %v1475
        %1929 = vmatpush.bf16.msra.mxu0 %v1473
        %1930 = vmatpush.bf16.msra.mxu0 %v1471
        %1931 = vmatmul.bf16.gmra.mxu0 %v1011
        %v1932 = vpop.f32.mrf.mxu0
        %v1933 = vadd.f32 %v1844, %v1932
        %v1934 = vpop.f32.mrf.mxu0
        %v1935 = vadd.f32 %v1846, %v1934
        %1936 = vmatmul.bf16.gmra.mxu0 %v1016
        %v1937 = vpop.f32.mrf.mxu0
        %v1938 = vadd.f32 %v1849, %v1937
        %v1939 = vpop.f32.mrf.mxu0
        %v1940 = vadd.f32 %v1851, %v1939
        %1941 = vmatmul.bf16.gmra.mxu0 %v1021
        %v1942 = vpop.f32.mrf.mxu0
        %v1943 = vadd.f32 %v1854, %v1942
        %v1944 = vpop.f32.mrf.mxu0
        %v1945 = vadd.f32 %v1856, %v1944
        %1946 = vmatmul.bf16.gmra.mxu0 %v1026
        %v1947 = vpop.f32.mrf.mxu0
        %v1948 = vadd.f32 %v1859, %v1947
        %v1949 = vpop.f32.mrf.mxu0
        %v1950 = vadd.f32 %v1861, %v1949
        %1951 = vmatmul.bf16.gmra.mxu0 %v1031
        %v1952 = vpop.f32.mrf.mxu0
        %v1953 = vadd.f32 %v1864, %v1952
        %v1954 = vpop.f32.mrf.mxu0
        %v1955 = vadd.f32 %v1866, %v1954
        %1956 = vmatmul.bf16.gmra.mxu0 %v1036
        %v1957 = vpop.f32.mrf.mxu0
        %v1958 = vadd.f32 %v1869, %v1957
        %v1959 = vpop.f32.mrf.mxu0
        %v1960 = vadd.f32 %v1871, %v1959
        %1961 = vmatmul.bf16.gmra.mxu0 %v1041
        %v1962 = vpop.f32.mrf.mxu0
        %v1963 = vadd.f32 %v1874, %v1962
        %v1964 = vpop.f32.mrf.mxu0
        %v1965 = vadd.f32 %v1876, %v1964
        %1966 = vmatmul.bf16.gmra.mxu0 %v1046
        %v1967 = vpop.f32.mrf.mxu0
        %v1968 = vadd.f32 %v1879, %v1967
        %v1969 = vpop.f32.mrf.mxu0
        %v1970 = vadd.f32 %v1881, %v1969
        %1971 = vmatmul.bf16.gmra.mxu0 %v1051
        %v1972 = vpop.f32.mrf.mxu0
        %v1973 = vadd.f32 %v1884, %v1972
        %v1974 = vpop.f32.mrf.mxu0
        %v1975 = vadd.f32 %v1886, %v1974
        %1976 = vmatmul.bf16.gmra.mxu0 %v1056
        %v1977 = vpop.f32.mrf.mxu0
        %v1978 = vadd.f32 %v1889, %v1977
        %v1979 = vpop.f32.mrf.mxu0
        %v1980 = vadd.f32 %v1891, %v1979
        %1981 = vmatmul.bf16.gmra.mxu0 %v1061
        %v1982 = vpop.f32.mrf.mxu0
        %v1983 = vadd.f32 %v1894, %v1982
        %v1984 = vpop.f32.mrf.mxu0
        %v1985 = vadd.f32 %v1896, %v1984
        %1986 = vmatmul.bf16.gmra.mxu0 %v1066
        %v1987 = vpop.f32.mrf.mxu0
        %v1988 = vadd.f32 %v1899, %v1987
        %v1989 = vpop.f32.mrf.mxu0
        %v1990 = vadd.f32 %v1901, %v1989
        %1991 = vmatmul.bf16.gmra.mxu0 %v1071
        %v1992 = vpop.f32.mrf.mxu0
        %v1993 = vadd.f32 %v1904, %v1992
        %v1994 = vpop.f32.mrf.mxu0
        %v1995 = vadd.f32 %v1906, %v1994
        %1996 = vmatmul.bf16.gmra.mxu0 %v1076
        %v1997 = vpop.f32.mrf.mxu0
        %v1998 = vadd.f32 %v1909, %v1997
        %v1999 = vpop.f32.mrf.mxu0
        %v2000 = vadd.f32 %v1911, %v1999
        %2001 = vmatmul.bf16.gmra.mxu0 %v1081
        %v2002 = vpop.f32.mrf.mxu0
        %v2003 = vadd.f32 %v1914, %v2002
        %v2004 = vpop.f32.mrf.mxu0
        %v2005 = vadd.f32 %v1916, %v2004
        %2006 = vmatmul.bf16.gmra.mxu0 %v1086
        %v2007 = vpop.f32.mrf.mxu0
        %v2008 = vadd.f32 %v1919, %v2007
        %v2009 = vpop.f32.mrf.mxu0
        %v2010 = vadd.f32 %v1921, %v2009
        %2011 = vdwg.mxu0
        %2012 = vmatpush.bf16.msra.mxu0 %v1422
        %2013 = vmatpush.bf16.msra.mxu0 %v1420
        %2014 = vmatpush.bf16.msra.mxu0 %v1418
        %2015 = vmatpush.bf16.msra.mxu0 %v1416
        %2016 = vmatpush.bf16.msra.mxu0 %v1414
        %2017 = vmatpush.bf16.msra.mxu0 %v1412
        %2018 = vmatpush.bf16.msra.mxu0 %v1410
        %2019 = vmatpush.bf16.msra.mxu0 %v1408
        %2020 = vmatmul.bf16.gmra.mxu0 %v1007
        %v2021 = vpop.f32.mrf.mxu0
        %v2022 = vadd.f32 0.0, %v2021
        %v2023 = vpop.f32.mrf.mxu0
        %v2024 = vadd.f32 0.0, %v2023
        %2025 = vmatmul.bf16.gmra.mxu0 %v1012
        %v2026 = vpop.f32.mrf.mxu0
        %v2027 = vadd.f32 0.0, %v2026
        %v2028 = vpop.f32.mrf.mxu0
        %v2029 = vadd.f32 0.0, %v2028
        %2030 = vmatmul.bf16.gmra.mxu0 %v1017
        %v2031 = vpop.f32.mrf.mxu0
        %v2032 = vadd.f32 0.0, %v2031
        %v2033 = vpop.f32.mrf.mxu0
        %v2034 = vadd.f32 0.0, %v2033
        %2035 = vmatmul.bf16.gmra.mxu0 %v1022
        %v2036 = vpop.f32.mrf.mxu0
        %v2037 = vadd.f32 0.0, %v2036
        %v2038 = vpop.f32.mrf.mxu0
        %v2039 = vadd.f32 0.0, %v2038
        %2040 = vmatmul.bf16.gmra.mxu0 %v1027
        %v2041 = vpop.f32.mrf.mxu0
        %v2042 = vadd.f32 0.0, %v2041
        %v2043 = vpop.f32.mrf.mxu0
        %v2044 = vadd.f32 0.0, %v2043
        %2045 = vmatmul.bf16.gmra.mxu0 %v1032
        %v2046 = vpop.f32.mrf.mxu0
        %v2047 = vadd.f32 0.0, %v2046
        %v2048 = vpop.f32.mrf.mxu0
        %v2049 = vadd.f32 0.0, %v2048
        %2050 = vmatmul.bf16.gmra.mxu0 %v1037
        %v2051 = vpop.f32.mrf.mxu0
        %v2052 = vadd.f32 0.0, %v2051
        %v2053 = vpop.f32.mrf.mxu0
        %v2054 = vadd.f32 0.0, %v2053
        %2055 = vmatmul.bf16.gmra.mxu0 %v1042
        %v2056 = vpop.f32.mrf.mxu0
        %v2057 = vadd.f32 0.0, %v2056
        %v2058 = vpop.f32.mrf.mxu0
        %v2059 = vadd.f32 0.0, %v2058
        %2060 = vmatmul.bf16.gmra.mxu0 %v1047
        %v2061 = vpop.f32.mrf.mxu0
        %v2062 = vadd.f32 0.0, %v2061
        %v2063 = vpop.f32.mrf.mxu0
        %v2064 = vadd.f32 0.0, %v2063
        %2065 = vmatmul.bf16.gmra.mxu0 %v1052
        %v2066 = vpop.f32.mrf.mxu0
        %v2067 = vadd.f32 0.0, %v2066
        %v2068 = vpop.f32.mrf.mxu0
        %v2069 = vadd.f32 0.0, %v2068
        %2070 = vmatmul.bf16.gmra.mxu0 %v1057
        %v2071 = vpop.f32.mrf.mxu0
        %v2072 = vadd.f32 0.0, %v2071
        %v2073 = vpop.f32.mrf.mxu0
        %v2074 = vadd.f32 0.0, %v2073
        %2075 = vmatmul.bf16.gmra.mxu0 %v1062
        %v2076 = vpop.f32.mrf.mxu0
        %v2077 = vadd.f32 0.0, %v2076
        %v2078 = vpop.f32.mrf.mxu0
        %v2079 = vadd.f32 0.0, %v2078
        %2080 = vmatmul.bf16.gmra.mxu0 %v1067
        %v2081 = vpop.f32.mrf.mxu0
        %v2082 = vadd.f32 0.0, %v2081
        %v2083 = vpop.f32.mrf.mxu0
        %v2084 = vadd.f32 0.0, %v2083
        %2085 = vmatmul.bf16.gmra.mxu0 %v1072
        %v2086 = vpop.f32.mrf.mxu0
        %v2087 = vadd.f32 0.0, %v2086
        %v2088 = vpop.f32.mrf.mxu0
        %v2089 = vadd.f32 0.0, %v2088
        %2090 = vmatmul.bf16.gmra.mxu0 %v1077
        %v2091 = vpop.f32.mrf.mxu0
        %v2092 = vadd.f32 0.0, %v2091
        %v2093 = vpop.f32.mrf.mxu0
        %v2094 = vadd.f32 0.0, %v2093
        %2095 = vmatmul.bf16.gmra.mxu0 %v1082
        %v2096 = vpop.f32.mrf.mxu0
        %v2097 = vadd.f32 0.0, %v2096
        %v2098 = vpop.f32.mrf.mxu0
        %v2099 = vadd.f32 0.0, %v2098
        %2100 = vdwg.mxu0
        %2101 = vmatpush.bf16.msra.mxu0 %v1438
        %2102 = vmatpush.bf16.msra.mxu0 %v1436
        %2103 = vmatpush.bf16.msra.mxu0 %v1434
        %2104 = vmatpush.bf16.msra.mxu0 %v1432
        %2105 = vmatpush.bf16.msra.mxu0 %v1430
        %2106 = vmatpush.bf16.msra.mxu0 %v1428
        %2107 = vmatpush.bf16.msra.mxu0 %v1426
        %2108 = vmatpush.bf16.msra.mxu0 %v1424
        %2109 = vmatmul.bf16.gmra.mxu0 %v1008
        %v2110 = vpop.f32.mrf.mxu0
        %v2111 = vadd.f32 %v2022, %v2110
        %v2112 = vpop.f32.mrf.mxu0
        %v2113 = vadd.f32 %v2024, %v2112
        %2114 = vmatmul.bf16.gmra.mxu0 %v1013
        %v2115 = vpop.f32.mrf.mxu0
        %v2116 = vadd.f32 %v2027, %v2115
        %v2117 = vpop.f32.mrf.mxu0
        %v2118 = vadd.f32 %v2029, %v2117
        %2119 = vmatmul.bf16.gmra.mxu0 %v1018
        %v2120 = vpop.f32.mrf.mxu0
        %v2121 = vadd.f32 %v2032, %v2120
        %v2122 = vpop.f32.mrf.mxu0
        %v2123 = vadd.f32 %v2034, %v2122
        %2124 = vmatmul.bf16.gmra.mxu0 %v1023
        %v2125 = vpop.f32.mrf.mxu0
        %v2126 = vadd.f32 %v2037, %v2125
        %v2127 = vpop.f32.mrf.mxu0
        %v2128 = vadd.f32 %v2039, %v2127
        %2129 = vmatmul.bf16.gmra.mxu0 %v1028
        %v2130 = vpop.f32.mrf.mxu0
        %v2131 = vadd.f32 %v2042, %v2130
        %v2132 = vpop.f32.mrf.mxu0
        %v2133 = vadd.f32 %v2044, %v2132
        %2134 = vmatmul.bf16.gmra.mxu0 %v1033
        %v2135 = vpop.f32.mrf.mxu0
        %v2136 = vadd.f32 %v2047, %v2135
        %v2137 = vpop.f32.mrf.mxu0
        %v2138 = vadd.f32 %v2049, %v2137
        %2139 = vmatmul.bf16.gmra.mxu0 %v1038
        %v2140 = vpop.f32.mrf.mxu0
        %v2141 = vadd.f32 %v2052, %v2140
        %v2142 = vpop.f32.mrf.mxu0
        %v2143 = vadd.f32 %v2054, %v2142
        %2144 = vmatmul.bf16.gmra.mxu0 %v1043
        %v2145 = vpop.f32.mrf.mxu0
        %v2146 = vadd.f32 %v2057, %v2145
        %v2147 = vpop.f32.mrf.mxu0
        %v2148 = vadd.f32 %v2059, %v2147
        %2149 = vmatmul.bf16.gmra.mxu0 %v1048
        %v2150 = vpop.f32.mrf.mxu0
        %v2151 = vadd.f32 %v2062, %v2150
        %v2152 = vpop.f32.mrf.mxu0
        %v2153 = vadd.f32 %v2064, %v2152
        %2154 = vmatmul.bf16.gmra.mxu0 %v1053
        %v2155 = vpop.f32.mrf.mxu0
        %v2156 = vadd.f32 %v2067, %v2155
        %v2157 = vpop.f32.mrf.mxu0
        %v2158 = vadd.f32 %v2069, %v2157
        %2159 = vmatmul.bf16.gmra.mxu0 %v1058
        %v2160 = vpop.f32.mrf.mxu0
        %v2161 = vadd.f32 %v2072, %v2160
        %v2162 = vpop.f32.mrf.mxu0
        %v2163 = vadd.f32 %v2074, %v2162
        %2164 = vmatmul.bf16.gmra.mxu0 %v1063
        %v2165 = vpop.f32.mrf.mxu0
        %v2166 = vadd.f32 %v2077, %v2165
        %v2167 = vpop.f32.mrf.mxu0
        %v2168 = vadd.f32 %v2079, %v2167
        %2169 = vmatmul.bf16.gmra.mxu0 %v1068
        %v2170 = vpop.f32.mrf.mxu0
        %v2171 = vadd.f32 %v2082, %v2170
        %v2172 = vpop.f32.mrf.mxu0
        %v2173 = vadd.f32 %v2084, %v2172
        %2174 = vmatmul.bf16.gmra.mxu0 %v1073
        %v2175 = vpop.f32.mrf.mxu0
        %v2176 = vadd.f32 %v2087, %v2175
        %v2177 = vpop.f32.mrf.mxu0
        %v2178 = vadd.f32 %v2089, %v2177
        %2179 = vmatmul.bf16.gmra.mxu0 %v1078
        %v2180 = vpop.f32.mrf.mxu0
        %v2181 = vadd.f32 %v2092, %v2180
        %v2182 = vpop.f32.mrf.mxu0
        %v2183 = vadd.f32 %v2094, %v2182
        %2184 = vmatmul.bf16.gmra.mxu0 %v1083
        %v2185 = vpop.f32.mrf.mxu0
        %v2186 = vadd.f32 %v2097, %v2185
        %v2187 = vpop.f32.mrf.mxu0
        %v2188 = vadd.f32 %v2099, %v2187
        %2189 = vdwg.mxu0
        %2190 = vmatpush.bf16.msra.mxu0 %v1454
        %2191 = vmatpush.bf16.msra.mxu0 %v1452
        %2192 = vmatpush.bf16.msra.mxu0 %v1450
        %2193 = vmatpush.bf16.msra.mxu0 %v1448
        %2194 = vmatpush.bf16.msra.mxu0 %v1446
        %2195 = vmatpush.bf16.msra.mxu0 %v1444
        %2196 = vmatpush.bf16.msra.mxu0 %v1442
        %2197 = vmatpush.bf16.msra.mxu0 %v1440
        %2198 = vmatmul.bf16.gmra.mxu0 %v1009
        %v2199 = vpop.f32.mrf.mxu0
        %v2200 = vadd.f32 %v2111, %v2199
        %v2201 = vpop.f32.mrf.mxu0
        %v2202 = vadd.f32 %v2113, %v2201
        %2203 = vmatmul.bf16.gmra.mxu0 %v1014
        %v2204 = vpop.f32.mrf.mxu0
        %v2205 = vadd.f32 %v2116, %v2204
        %v2206 = vpop.f32.mrf.mxu0
        %v2207 = vadd.f32 %v2118, %v2206
        %2208 = vmatmul.bf16.gmra.mxu0 %v1019
        %v2209 = vpop.f32.mrf.mxu0
        %v2210 = vadd.f32 %v2121, %v2209
        %v2211 = vpop.f32.mrf.mxu0
        %v2212 = vadd.f32 %v2123, %v2211
        %2213 = vmatmul.bf16.gmra.mxu0 %v1024
        %v2214 = vpop.f32.mrf.mxu0
        %v2215 = vadd.f32 %v2126, %v2214
        %v2216 = vpop.f32.mrf.mxu0
        %v2217 = vadd.f32 %v2128, %v2216
        %2218 = vmatmul.bf16.gmra.mxu0 %v1029
        %v2219 = vpop.f32.mrf.mxu0
        %v2220 = vadd.f32 %v2131, %v2219
        %v2221 = vpop.f32.mrf.mxu0
        %v2222 = vadd.f32 %v2133, %v2221
        %2223 = vmatmul.bf16.gmra.mxu0 %v1034
        %v2224 = vpop.f32.mrf.mxu0
        %v2225 = vadd.f32 %v2136, %v2224
        %v2226 = vpop.f32.mrf.mxu0
        %v2227 = vadd.f32 %v2138, %v2226
        %2228 = vmatmul.bf16.gmra.mxu0 %v1039
        %v2229 = vpop.f32.mrf.mxu0
        %v2230 = vadd.f32 %v2141, %v2229
        %v2231 = vpop.f32.mrf.mxu0
        %v2232 = vadd.f32 %v2143, %v2231
        %2233 = vmatmul.bf16.gmra.mxu0 %v1044
        %v2234 = vpop.f32.mrf.mxu0
        %v2235 = vadd.f32 %v2146, %v2234
        %v2236 = vpop.f32.mrf.mxu0
        %v2237 = vadd.f32 %v2148, %v2236
        %2238 = vmatmul.bf16.gmra.mxu0 %v1049
        %v2239 = vpop.f32.mrf.mxu0
        %v2240 = vadd.f32 %v2151, %v2239
        %v2241 = vpop.f32.mrf.mxu0
        %v2242 = vadd.f32 %v2153, %v2241
        %2243 = vmatmul.bf16.gmra.mxu0 %v1054
        %v2244 = vpop.f32.mrf.mxu0
        %v2245 = vadd.f32 %v2156, %v2244
        %v2246 = vpop.f32.mrf.mxu0
        %v2247 = vadd.f32 %v2158, %v2246
        %2248 = vmatmul.bf16.gmra.mxu0 %v1059
        %v2249 = vpop.f32.mrf.mxu0
        %v2250 = vadd.f32 %v2161, %v2249
        %v2251 = vpop.f32.mrf.mxu0
        %v2252 = vadd.f32 %v2163, %v2251
        %2253 = vmatmul.bf16.gmra.mxu0 %v1064
        %v2254 = vpop.f32.mrf.mxu0
        %v2255 = vadd.f32 %v2166, %v2254
        %v2256 = vpop.f32.mrf.mxu0
        %v2257 = vadd.f32 %v2168, %v2256
        %2258 = vmatmul.bf16.gmra.mxu0 %v1069
        %v2259 = vpop.f32.mrf.mxu0
        %v2260 = vadd.f32 %v2171, %v2259
        %v2261 = vpop.f32.mrf.mxu0
        %v2262 = vadd.f32 %v2173, %v2261
        %2263 = vmatmul.bf16.gmra.mxu0 %v1074
        %v2264 = vpop.f32.mrf.mxu0
        %v2265 = vadd.f32 %v2176, %v2264
        %v2266 = vpop.f32.mrf.mxu0
        %v2267 = vadd.f32 %v2178, %v2266
        %2268 = vmatmul.bf16.gmra.mxu0 %v1079
        %v2269 = vpop.f32.mrf.mxu0
        %v2270 = vadd.f32 %v2181, %v2269
        %v2271 = vpop.f32.mrf.mxu0
        %v2272 = vadd.f32 %v2183, %v2271
        %2273 = vmatmul.bf16.gmra.mxu0 %v1084
        %v2274 = vpop.f32.mrf.mxu0
        %v2275 = vadd.f32 %v2186, %v2274
        %v2276 = vpop.f32.mrf.mxu0
        %v2277 = vadd.f32 %v2188, %v2276
        %2278 = vdwg.mxu0
        %2279 = vmatpush.bf16.msra.mxu0 %v1470
        %2280 = vmatpush.bf16.msra.mxu0 %v1468
        %2281 = vmatpush.bf16.msra.mxu0 %v1466
        %2282 = vmatpush.bf16.msra.mxu0 %v1464
        %2283 = vmatpush.bf16.msra.mxu0 %v1462
        %2284 = vmatpush.bf16.msra.mxu0 %v1460
        %2285 = vmatpush.bf16.msra.mxu0 %v1458
        %2286 = vmatpush.bf16.msra.mxu0 %v1456
        %2287 = vmatmul.bf16.gmra.mxu0 %v1010
        %v2288 = vpop.f32.mrf.mxu0
        %v2289 = vadd.f32 %v2200, %v2288
        %v2290 = vpop.f32.mrf.mxu0
        %v2291 = vadd.f32 %v2202, %v2290
        %2292 = vmatmul.bf16.gmra.mxu0 %v1015
        %v2293 = vpop.f32.mrf.mxu0
        %v2294 = vadd.f32 %v2205, %v2293
        %v2295 = vpop.f32.mrf.mxu0
        %v2296 = vadd.f32 %v2207, %v2295
        %2297 = vmatmul.bf16.gmra.mxu0 %v1020
        %v2298 = vpop.f32.mrf.mxu0
        %v2299 = vadd.f32 %v2210, %v2298
        %v2300 = vpop.f32.mrf.mxu0
        %v2301 = vadd.f32 %v2212, %v2300
        %2302 = vmatmul.bf16.gmra.mxu0 %v1025
        %v2303 = vpop.f32.mrf.mxu0
        %v2304 = vadd.f32 %v2215, %v2303
        %v2305 = vpop.f32.mrf.mxu0
        %v2306 = vadd.f32 %v2217, %v2305
        %2307 = vmatmul.bf16.gmra.mxu0 %v1030
        %v2308 = vpop.f32.mrf.mxu0
        %v2309 = vadd.f32 %v2220, %v2308
        %v2310 = vpop.f32.mrf.mxu0
        %v2311 = vadd.f32 %v2222, %v2310
        %2312 = vmatmul.bf16.gmra.mxu0 %v1035
        %v2313 = vpop.f32.mrf.mxu0
        %v2314 = vadd.f32 %v2225, %v2313
        %v2315 = vpop.f32.mrf.mxu0
        %v2316 = vadd.f32 %v2227, %v2315
        %2317 = vmatmul.bf16.gmra.mxu0 %v1040
        %v2318 = vpop.f32.mrf.mxu0
        %v2319 = vadd.f32 %v2230, %v2318
        %v2320 = vpop.f32.mrf.mxu0
        %v2321 = vadd.f32 %v2232, %v2320
        %2322 = vmatmul.bf16.gmra.mxu0 %v1045
        %v2323 = vpop.f32.mrf.mxu0
        %v2324 = vadd.f32 %v2235, %v2323
        %v2325 = vpop.f32.mrf.mxu0
        %v2326 = vadd.f32 %v2237, %v2325
        %2327 = vmatmul.bf16.gmra.mxu0 %v1050
        %v2328 = vpop.f32.mrf.mxu0
        %v2329 = vadd.f32 %v2240, %v2328
        %v2330 = vpop.f32.mrf.mxu0
        %v2331 = vadd.f32 %v2242, %v2330
        %2332 = vmatmul.bf16.gmra.mxu0 %v1055
        %v2333 = vpop.f32.mrf.mxu0
        %v2334 = vadd.f32 %v2245, %v2333
        %v2335 = vpop.f32.mrf.mxu0
        %v2336 = vadd.f32 %v2247, %v2335
        %2337 = vmatmul.bf16.gmra.mxu0 %v1060
        %v2338 = vpop.f32.mrf.mxu0
        %v2339 = vadd.f32 %v2250, %v2338
        %v2340 = vpop.f32.mrf.mxu0
        %v2341 = vadd.f32 %v2252, %v2340
        %2342 = vmatmul.bf16.gmra.mxu0 %v1065
        %v2343 = vpop.f32.mrf.mxu0
        %v2344 = vadd.f32 %v2255, %v2343
        %v2345 = vpop.f32.mrf.mxu0
        %v2346 = vadd.f32 %v2257, %v2345
        %2347 = vmatmul.bf16.gmra.mxu0 %v1070
        %v2348 = vpop.f32.mrf.mxu0
        %v2349 = vadd.f32 %v2260, %v2348
        %v2350 = vpop.f32.mrf.mxu0
        %v2351 = vadd.f32 %v2262, %v2350
        %2352 = vmatmul.bf16.gmra.mxu0 %v1075
        %v2353 = vpop.f32.mrf.mxu0
        %v2354 = vadd.f32 %v2265, %v2353
        %v2355 = vpop.f32.mrf.mxu0
        %v2356 = vadd.f32 %v2267, %v2355
        %2357 = vmatmul.bf16.gmra.mxu0 %v1080
        %v2358 = vpop.f32.mrf.mxu0
        %v2359 = vadd.f32 %v2270, %v2358
        %v2360 = vpop.f32.mrf.mxu0
        %v2361 = vadd.f32 %v2272, %v2360
        %2362 = vmatmul.bf16.gmra.mxu0 %v1085
        %v2363 = vpop.f32.mrf.mxu0
        %v2364 = vadd.f32 %v2275, %v2363
        %v2365 = vpop.f32.mrf.mxu0
        %v2366 = vadd.f32 %v2277, %v2365
        %2367 = vdwg.mxu0
        %2368 = vmatpush.bf16.msra.mxu0 %v1486
        %2369 = vmatpush.bf16.msra.mxu0 %v1484
        %2370 = vmatpush.bf16.msra.mxu0 %v1482
        %2371 = vmatpush.bf16.msra.mxu0 %v1480
        %2372 = vmatpush.bf16.msra.mxu0 %v1478
        %2373 = vmatpush.bf16.msra.mxu0 %v1476
        %2374 = vmatpush.bf16.msra.mxu0 %v1474
        %2375 = vmatpush.bf16.msra.mxu0 %v1472
        %2376 = vmatmul.bf16.gmra.mxu0 %v1011
        %v2377 = vpop.f32.mrf.mxu0
        %v2378 = vadd.f32 %v2289, %v2377
        %v2379 = vpop.f32.mrf.mxu0
        %v2380 = vadd.f32 %v2291, %v2379
        %2381 = vmatmul.bf16.gmra.mxu0 %v1016
        %v2382 = vpop.f32.mrf.mxu0
        %v2383 = vadd.f32 %v2294, %v2382
        %v2384 = vpop.f32.mrf.mxu0
        %v2385 = vadd.f32 %v2296, %v2384
        %2386 = vmatmul.bf16.gmra.mxu0 %v1021
        %v2387 = vpop.f32.mrf.mxu0
        %v2388 = vadd.f32 %v2299, %v2387
        %v2389 = vpop.f32.mrf.mxu0
        %v2390 = vadd.f32 %v2301, %v2389
        %2391 = vmatmul.bf16.gmra.mxu0 %v1026
        %v2392 = vpop.f32.mrf.mxu0
        %v2393 = vadd.f32 %v2304, %v2392
        %v2394 = vpop.f32.mrf.mxu0
        %v2395 = vadd.f32 %v2306, %v2394
        %2396 = vmatmul.bf16.gmra.mxu0 %v1031
        %v2397 = vpop.f32.mrf.mxu0
        %v2398 = vadd.f32 %v2309, %v2397
        %v2399 = vpop.f32.mrf.mxu0
        %v2400 = vadd.f32 %v2311, %v2399
        %2401 = vmatmul.bf16.gmra.mxu0 %v1036
        %v2402 = vpop.f32.mrf.mxu0
        %v2403 = vadd.f32 %v2314, %v2402
        %v2404 = vpop.f32.mrf.mxu0
        %v2405 = vadd.f32 %v2316, %v2404
        %2406 = vmatmul.bf16.gmra.mxu0 %v1041
        %v2407 = vpop.f32.mrf.mxu0
        %v2408 = vadd.f32 %v2319, %v2407
        %v2409 = vpop.f32.mrf.mxu0
        %v2410 = vadd.f32 %v2321, %v2409
        %2411 = vmatmul.bf16.gmra.mxu0 %v1046
        %v2412 = vpop.f32.mrf.mxu0
        %v2413 = vadd.f32 %v2324, %v2412
        %v2414 = vpop.f32.mrf.mxu0
        %v2415 = vadd.f32 %v2326, %v2414
        %2416 = vmatmul.bf16.gmra.mxu0 %v1051
        %v2417 = vpop.f32.mrf.mxu0
        %v2418 = vadd.f32 %v2329, %v2417
        %v2419 = vpop.f32.mrf.mxu0
        %v2420 = vadd.f32 %v2331, %v2419
        %2421 = vmatmul.bf16.gmra.mxu0 %v1056
        %v2422 = vpop.f32.mrf.mxu0
        %v2423 = vadd.f32 %v2334, %v2422
        %v2424 = vpop.f32.mrf.mxu0
        %v2425 = vadd.f32 %v2336, %v2424
        %2426 = vmatmul.bf16.gmra.mxu0 %v1061
        %v2427 = vpop.f32.mrf.mxu0
        %v2428 = vadd.f32 %v2339, %v2427
        %v2429 = vpop.f32.mrf.mxu0
        %v2430 = vadd.f32 %v2341, %v2429
        %2431 = vmatmul.bf16.gmra.mxu0 %v1066
        %v2432 = vpop.f32.mrf.mxu0
        %v2433 = vadd.f32 %v2344, %v2432
        %v2434 = vpop.f32.mrf.mxu0
        %v2435 = vadd.f32 %v2346, %v2434
        %2436 = vmatmul.bf16.gmra.mxu0 %v1071
        %v2437 = vpop.f32.mrf.mxu0
        %v2438 = vadd.f32 %v2349, %v2437
        %v2439 = vpop.f32.mrf.mxu0
        %v2440 = vadd.f32 %v2351, %v2439
        %2441 = vmatmul.bf16.gmra.mxu0 %v1076
        %v2442 = vpop.f32.mrf.mxu0
        %v2443 = vadd.f32 %v2354, %v2442
        %v2444 = vpop.f32.mrf.mxu0
        %v2445 = vadd.f32 %v2356, %v2444
        %2446 = vmatmul.bf16.gmra.mxu0 %v1081
        %v2447 = vpop.f32.mrf.mxu0
        %v2448 = vadd.f32 %v2359, %v2447
        %v2449 = vpop.f32.mrf.mxu0
        %v2450 = vadd.f32 %v2361, %v2449
        %2451 = vmatmul.bf16.gmra.mxu0 %v1086
        %v2452 = vpop.f32.mrf.mxu0
        %v2453 = vadd.f32 %v2364, %v2452
        %v2454 = vpop.f32.mrf.mxu0
        %v2455 = vadd.f32 %v2366, %v2454
        %2456 = vdwg.mxu0
        %v2457 = vadd.f32 %v511, %v1933
        %v2458 = vadd.f32 %v512, %v2378
        %v2459 = vadd.f32 %v513, %v1935
        %v2460 = vadd.f32 %v514, %v2380
        %v2461 = vadd.f32 %v515, %v1938
        %v2462 = vadd.f32 %v516, %v2383
        %v2463 = vadd.f32 %v517, %v1940
        %v2464 = vadd.f32 %v518, %v2385
        %v2465 = vadd.f32 %v519, %v1943
        %v2466 = vadd.f32 %v520, %v2388
        %v2467 = vadd.f32 %v521, %v1945
        %v2468 = vadd.f32 %v522, %v2390
        %v2469 = vadd.f32 %v523, %v1948
        %v2470 = vadd.f32 %v524, %v2393
        %v2471 = vadd.f32 %v525, %v1950
        %v2472 = vadd.f32 %v526, %v2395
        %v2473 = vadd.f32 %v527, %v1953
        %v2474 = vadd.f32 %v528, %v2398
        %v2475 = vadd.f32 %v529, %v1955
        %v2476 = vadd.f32 %v530, %v2400
        %v2477 = vadd.f32 %v531, %v1958
        %v2478 = vadd.f32 %v532, %v2403
        %v2479 = vadd.f32 %v533, %v1960
        %v2480 = vadd.f32 %v534, %v2405
        %v2481 = vadd.f32 %v535, %v1963
        %v2482 = vadd.f32 %v536, %v2408
        %v2483 = vadd.f32 %v537, %v1965
        %v2484 = vadd.f32 %v538, %v2410
        %v2485 = vadd.f32 %v539, %v1968
        %v2486 = vadd.f32 %v540, %v2413
        %v2487 = vadd.f32 %v541, %v1970
        %v2488 = vadd.f32 %v542, %v2415
        %v2489 = vadd.f32 %v543, %v1973
        %v2490 = vadd.f32 %v544, %v2418
        %v2491 = vadd.f32 %v545, %v1975
        %v2492 = vadd.f32 %v546, %v2420
        %v2493 = vadd.f32 %v547, %v1978
        %v2494 = vadd.f32 %v548, %v2423
        %v2495 = vadd.f32 %v549, %v1980
        %v2496 = vadd.f32 %v550, %v2425
        %v2497 = vadd.f32 %v551, %v1983
        %v2498 = vadd.f32 %v552, %v2428
        %v2499 = vadd.f32 %v553, %v1985
        %v2500 = vadd.f32 %v554, %v2430
        %v2501 = vadd.f32 %v555, %v1988
        %v2502 = vadd.f32 %v556, %v2433
        %v2503 = vadd.f32 %v557, %v1990
        %v2504 = vadd.f32 %v558, %v2435
        %v2505 = vadd.f32 %v559, %v1993
        %v2506 = vadd.f32 %v560, %v2438
        %v2507 = vadd.f32 %v561, %v1995
        %v2508 = vadd.f32 %v562, %v2440
        %v2509 = vadd.f32 %v563, %v1998
        %v2510 = vadd.f32 %v564, %v2443
        %v2511 = vadd.f32 %v565, %v2000
        %v2512 = vadd.f32 %v566, %v2445
        %v2513 = vadd.f32 %v567, %v2003
        %v2514 = vadd.f32 %v568, %v2448
        %v2515 = vadd.f32 %v569, %v2005
        %v2516 = vadd.f32 %v570, %v2450
        %v2517 = vadd.f32 %v571, %v2008
        %v2518 = vadd.f32 %v572, %v2453
        %v2519 = vadd.f32 %v573, %v2010
        %v2520 = vadd.f32 %v574, %v2455
        %2521 = vst [vmem:[#allocation2] sm:$0xff] %v2457
        %vm2522 = vcmask 556032
        %2523 = vst.msk [vmem:[#allocation2 + $0x8] sm:$0xff] %vm2522, %v2458
        %2524 = vst [vmem:[#allocation2 + $0x10] sm:$0xff] %v2459
        %2525 = vst.msk [vmem:[#allocation2 + $0x18] sm:$0xff] %vm2522, %v2460
        %2526 = vst [vmem:[#allocation2 + $0x20] sm:$0xff] %v2461
        %2527 = vst.msk [vmem:[#allocation2 + $0x28] sm:$0xff] %vm2522, %v2462
        %2528 = vst [vmem:[#allocation2 + $0x30] sm:$0xff] %v2463
        %2529 = vst.msk [vmem:[#allocation2 + $0x38] sm:$0xff] %vm2522, %v2464
        %2530 = vst [vmem:[#allocation2 + $0x40] sm:$0xff] %v2465
        %2531 = vst.msk [vmem:[#allocation2 + $0x48] sm:$0xff] %vm2522, %v2466
        %2532 = vst [vmem:[#allocation2 + $0x50] sm:$0xff] %v2467
        %2533 = vst.msk [vmem:[#allocation2 + $0x58] sm:$0xff] %vm2522, %v2468
        %2534 = vst [vmem:[#allocation2 + $0x60] sm:$0xff] %v2469
        %2535 = vst.msk [vmem:[#allocation2 + $0x68] sm:$0xff] %vm2522, %v2470
        %2536 = vst [vmem:[#allocation2 + $0x70] sm:$0xff] %v2471
        %2537 = vst.msk [vmem:[#allocation2 + $0x78] sm:$0xff] %vm2522, %v2472
        %2538 = vst [vmem:[#allocation2 + $0x80] sm:$0xff] %v2473
        %2539 = vst.msk [vmem:[#allocation2 + $0x88] sm:$0xff] %vm2522, %v2474
        %2540 = vst [vmem:[#allocation2 + $0x90] sm:$0xff] %v2475
        %2541 = vst.msk [vmem:[#allocation2 + $0x98] sm:$0xff] %vm2522, %v2476
        %2542 = vst [vmem:[#allocation2 + $0xa0] sm:$0xff] %v2477
        %2543 = vst.msk [vmem:[#allocation2 + $0xa8] sm:$0xff] %vm2522, %v2478
        %2544 = vst [vmem:[#allocation2 + $0xb0] sm:$0xff] %v2479
        %2545 = vst.msk [vmem:[#allocation2 + $0xb8] sm:$0xff] %vm2522, %v2480
        %2546 = vst [vmem:[#allocation2 + $0xc0] sm:$0xff] %v2481
        %2547 = vst.msk [vmem:[#allocation2 + $0xc8] sm:$0xff] %vm2522, %v2482
        %2548 = vst [vmem:[#allocation2 + $0xd0] sm:$0xff] %v2483
        %2549 = vst.msk [vmem:[#allocation2 + $0xd8] sm:$0xff] %vm2522, %v2484
        %2550 = vst [vmem:[#allocation2 + $0xe0] sm:$0xff] %v2485
        %2551 = vst.msk [vmem:[#allocation2 + $0xe8] sm:$0xff] %vm2522, %v2486
        %2552 = vst [vmem:[#allocation2 + $0xf0] sm:$0xff] %v2487
        %2553 = vst.msk [vmem:[#allocation2 + $0xf8] sm:$0xff] %vm2522, %v2488
        %2554 = vst [vmem:[#allocation2 + $0x100] sm:$0xff] %v2489
        %2555 = vst.msk [vmem:[#allocation2 + $0x108] sm:$0xff] %vm2522, %v2490
        %2556 = vst [vmem:[#allocation2 + $0x110] sm:$0xff] %v2491
        %2557 = vst.msk [vmem:[#allocation2 + $0x118] sm:$0xff] %vm2522, %v2492
        %2558 = vst [vmem:[#allocation2 + $0x120] sm:$0xff] %v2493
        %2559 = vst.msk [vmem:[#allocation2 + $0x128] sm:$0xff] %vm2522, %v2494
        %2560 = vst [vmem:[#allocation2 + $0x130] sm:$0xff] %v2495
        %2561 = vst.msk [vmem:[#allocation2 + $0x138] sm:$0xff] %vm2522, %v2496
        %2562 = vst [vmem:[#allocation2 + $0x140] sm:$0xff] %v2497
        %2563 = vst.msk [vmem:[#allocation2 + $0x148] sm:$0xff] %vm2522, %v2498
        %2564 = vst [vmem:[#allocation2 + $0x150] sm:$0xff] %v2499
        %2565 = vst.msk [vmem:[#allocation2 + $0x158] sm:$0xff] %vm2522, %v2500
        %2566 = vst [vmem:[#allocation2 + $0x160] sm:$0xff] %v2501
        %2567 = vst.msk [vmem:[#allocation2 + $0x168] sm:$0xff] %vm2522, %v2502
        %2568 = vst [vmem:[#allocation2 + $0x170] sm:$0xff] %v2503
        %2569 = vst.msk [vmem:[#allocation2 + $0x178] sm:$0xff] %vm2522, %v2504
        %2570 = vst [vmem:[#allocation2 + $0x180] sm:$0xff] %v2505
        %2571 = vst.msk [vmem:[#allocation2 + $0x188] sm:$0xff] %vm2522, %v2506
        %2572 = vst [vmem:[#allocation2 + $0x190] sm:$0xff] %v2507
        %2573 = vst.msk [vmem:[#allocation2 + $0x198] sm:$0xff] %vm2522, %v2508
        %2574 = vst [vmem:[#allocation2 + $0x1a0] sm:$0xff] %v2509
        %2575 = vst.msk [vmem:[#allocation2 + $0x1a8] sm:$0xff] %vm2522, %v2510
        %2576 = vst [vmem:[#allocation2 + $0x1b0] sm:$0xff] %v2511
        %2577 = vst.msk [vmem:[#allocation2 + $0x1b8] sm:$0xff] %vm2522, %v2512
        %2578 = vst [vmem:[#allocation2 + $0x1c0] sm:$0xff] %v2513
        %2579 = vst.msk [vmem:[#allocation2 + $0x1c8] sm:$0xff] %vm2522, %v2514
        %2580 = vst [vmem:[#allocation2 + $0x1d0] sm:$0xff] %v2515
        %2581 = vst.msk [vmem:[#allocation2 + $0x1d8] sm:$0xff] %vm2522, %v2516
        %2582 = vst [vmem:[#allocation2 + $0x1e0] sm:$0xff] %v2517
        %2583 = vst.msk [vmem:[#allocation2 + $0x1e8] sm:$0xff] %vm2522, %v2518
        %2584 = vst [vmem:[#allocation2 + $0x1f0] sm:$0xff] %v2519
        %2585 = vst.msk [vmem:[#allocation2 + $0x1f8] sm:$0xff] %vm2522, %v2520
        %p2586 = scmp.eq.s32.totalorder %s20, 1
        // Predicated region
        $region59: #{tpu_custom_call.1} parent=49 // pred_check
          %p2587 = pneg %p2586
        $region60: #{tpu_custom_call.1} parent=49 // pred_check_branch
          %2589 = sbr.rel (%p2587) target = $region62
        $region61: #{tpu_custom_call.1} parent=49 // pred_region
          %v2590 = vld [vmem:[#allocation2] sm:$0xff]
          %v2591 = vld [vmem:[#allocation2 + $0x8] sm:$0xff]
          %v2592 = vld [vmem:[#allocation2 + $0x10] sm:$0xff]
          %v2593 = vld [vmem:[#allocation2 + $0x18] sm:$0xff]
          %v2594 = vld [vmem:[#allocation2 + $0x20] sm:$0xff]
          %v2595 = vld [vmem:[#allocation2 + $0x28] sm:$0xff]
          %v2596 = vld [vmem:[#allocation2 + $0x30] sm:$0xff]
          %v2597 = vld [vmem:[#allocation2 + $0x38] sm:$0xff]
          %v2598 = vld [vmem:[#allocation2 + $0x40] sm:$0xff]
          %v2599 = vld [vmem:[#allocation2 + $0x48] sm:$0xff]
          %v2600 = vld [vmem:[#allocation2 + $0x50] sm:$0xff]
          %v2601 = vld [vmem:[#allocation2 + $0x58] sm:$0xff]
          %v2602 = vld [vmem:[#allocation2 + $0x60] sm:$0xff]
          %v2603 = vld [vmem:[#allocation2 + $0x68] sm:$0xff]
          %v2604 = vld [vmem:[#allocation2 + $0x70] sm:$0xff]
          %v2605 = vld [vmem:[#allocation2 + $0x78] sm:$0xff]
          %v2606 = vld [vmem:[#allocation2 + $0x80] sm:$0xff]
          %v2607 = vld [vmem:[#allocation2 + $0x88] sm:$0xff]
          %v2608 = vld [vmem:[#allocation2 + $0x90] sm:$0xff]
          %v2609 = vld [vmem:[#allocation2 + $0x98] sm:$0xff]
          %v2610 = vld [vmem:[#allocation2 + $0xa0] sm:$0xff]
          %v2611 = vld [vmem:[#allocation2 + $0xa8] sm:$0xff]
          %v2612 = vld [vmem:[#allocation2 + $0xb0] sm:$0xff]
          %v2613 = vld [vmem:[#allocation2 + $0xb8] sm:$0xff]
          %v2614 = vld [vmem:[#allocation2 + $0xc0] sm:$0xff]
          %v2615 = vld [vmem:[#allocation2 + $0xc8] sm:$0xff]
          %v2616 = vld [vmem:[#allocation2 + $0xd0] sm:$0xff]
          %v2617 = vld [vmem:[#allocation2 + $0xd8] sm:$0xff]
          %v2618 = vld [vmem:[#allocation2 + $0xe0] sm:$0xff]
          %v2619 = vld [vmem:[#allocation2 + $0xe8] sm:$0xff]
          %v2620 = vld [vmem:[#allocation2 + $0xf0] sm:$0xff]
          %v2621 = vld [vmem:[#allocation2 + $0xf8] sm:$0xff]
          %v2622 = vld [vmem:[#allocation2 + $0x100] sm:$0xff]
          %v2623 = vld [vmem:[#allocation2 + $0x108] sm:$0xff]
          %v2624 = vld [vmem:[#allocation2 + $0x110] sm:$0xff]
          %v2625 = vld [vmem:[#allocation2 + $0x118] sm:$0xff]
          %v2626 = vld [vmem:[#allocation2 + $0x120] sm:$0xff]
          %v2627 = vld [vmem:[#allocation2 + $0x128] sm:$0xff]
          %v2628 = vld [vmem:[#allocation2 + $0x130] sm:$0xff]
          %v2629 = vld [vmem:[#allocation2 + $0x138] sm:$0xff]
          %v2630 = vld [vmem:[#allocation2 + $0x140] sm:$0xff]
          %v2631 = vld [vmem:[#allocation2 + $0x148] sm:$0xff]
          %v2632 = vld [vmem:[#allocation2 + $0x150] sm:$0xff]
          %v2633 = vld [vmem:[#allocation2 + $0x158] sm:$0xff]
          %v2634 = vld [vmem:[#allocation2 + $0x160] sm:$0xff]
          %v2635 = vld [vmem:[#allocation2 + $0x168] sm:$0xff]
          %v2636 = vld [vmem:[#allocation2 + $0x170] sm:$0xff]
          %v2637 = vld [vmem:[#allocation2 + $0x178] sm:$0xff]
          %v2638 = vld [vmem:[#allocation2 + $0x180] sm:$0xff]
          %v2639 = vld [vmem:[#allocation2 + $0x188] sm:$0xff]
          %v2640 = vld [vmem:[#allocation2 + $0x190] sm:$0xff]
          %v2641 = vld [vmem:[#allocation2 + $0x198] sm:$0xff]
          %v2642 = vld [vmem:[#allocation2 + $0x1a0] sm:$0xff]
          %v2643 = vld [vmem:[#allocation2 + $0x1a8] sm:$0xff]
          %v2644 = vld [vmem:[#allocation2 + $0x1b0] sm:$0xff]
          %v2645 = vld [vmem:[#allocation2 + $0x1b8] sm:$0xff]
          %v2646 = vld [vmem:[#allocation2 + $0x1c0] sm:$0xff]
          %v2647 = vld [vmem:[#allocation2 + $0x1c8] sm:$0xff]
          %v2648 = vld [vmem:[#allocation2 + $0x1d0] sm:$0xff]
          %v2649 = vld [vmem:[#allocation2 + $0x1d8] sm:$0xff]
          %v2650 = vld [vmem:[#allocation2 + $0x1e0] sm:$0xff]
          %v2651 = vld [vmem:[#allocation2 + $0x1e8] sm:$0xff]
          %v2652 = vld [vmem:[#allocation2 + $0x1f0] sm:$0xff]
          %v2653 = vld [vmem:[#allocation2 + $0x1f8] sm:$0xff]
          %2654 = vst [vmem:[%s440] sm:$0xff] %v2590
          %2655 = vst.msk [vmem:[%s440 + $0x8] sm:$0xff] %vm2522, %v2591
          %2656 = vst [vmem:[%s440 + $0x10] sm:$0xff] %v2592
          %2657 = vst.msk [vmem:[%s440 + $0x18] sm:$0xff] %vm2522, %v2593
          %2658 = vst [vmem:[%s440 + $0x20] sm:$0xff] %v2594
          %2659 = vst.msk [vmem:[%s440 + $0x28] sm:$0xff] %vm2522, %v2595
          %2660 = vst [vmem:[%s440 + $0x30] sm:$0xff] %v2596
          %2661 = vst.msk [vmem:[%s440 + $0x38] sm:$0xff] %vm2522, %v2597
          %2662 = vst [vmem:[%s440 + $0x40] sm:$0xff] %v2598
          %2663 = vst.msk [vmem:[%s440 + $0x48] sm:$0xff] %vm2522, %v2599
          %2664 = vst [vmem:[%s440 + $0x50] sm:$0xff] %v2600
          %2665 = vst.msk [vmem:[%s440 + $0x58] sm:$0xff] %vm2522, %v2601
          %2666 = vst [vmem:[%s440 + $0x60] sm:$0xff] %v2602
          %2667 = vst.msk [vmem:[%s440 + $0x68] sm:$0xff] %vm2522, %v2603
          %2668 = vst [vmem:[%s440 + $0x70] sm:$0xff] %v2604
          %2669 = vst.msk [vmem:[%s440 + $0x78] sm:$0xff] %vm2522, %v2605
          %2670 = vst [vmem:[%s440 + $0x80] sm:$0xff] %v2606
          %2671 = vst.msk [vmem:[%s440 + $0x88] sm:$0xff] %vm2522, %v2607
          %2672 = vst [vmem:[%s440 + $0x90] sm:$0xff] %v2608
          %2673 = vst.msk [vmem:[%s440 + $0x98] sm:$0xff] %vm2522, %v2609
          %2674 = vst [vmem:[%s440 + $0xa0] sm:$0xff] %v2610
          %2675 = vst.msk [vmem:[%s440 + $0xa8] sm:$0xff] %vm2522, %v2611
          %2676 = vst [vmem:[%s440 + $0xb0] sm:$0xff] %v2612
          %2677 = vst.msk [vmem:[%s440 + $0xb8] sm:$0xff] %vm2522, %v2613
          %2678 = vst [vmem:[%s440 + $0xc0] sm:$0xff] %v2614
          %2679 = vst.msk [vmem:[%s440 + $0xc8] sm:$0xff] %vm2522, %v2615
          %2680 = vst [vmem:[%s440 + $0xd0] sm:$0xff] %v2616
          %2681 = vst.msk [vmem:[%s440 + $0xd8] sm:$0xff] %vm2522, %v2617
          %2682 = vst [vmem:[%s440 + $0xe0] sm:$0xff] %v2618
          %2683 = vst.msk [vmem:[%s440 + $0xe8] sm:$0xff] %vm2522, %v2619
          %2684 = vst [vmem:[%s440 + $0xf0] sm:$0xff] %v2620
          %2685 = vst.msk [vmem:[%s440 + $0xf8] sm:$0xff] %vm2522, %v2621
          %2686 = vst [vmem:[%s440 + $0x100] sm:$0xff] %v2622
          %2687 = vst.msk [vmem:[%s440 + $0x108] sm:$0xff] %vm2522, %v2623
          %2688 = vst [vmem:[%s440 + $0x110] sm:$0xff] %v2624
          %2689 = vst.msk [vmem:[%s440 + $0x118] sm:$0xff] %vm2522, %v2625
          %2690 = vst [vmem:[%s440 + $0x120] sm:$0xff] %v2626
          %2691 = vst.msk [vmem:[%s440 + $0x128] sm:$0xff] %vm2522, %v2627
          %2692 = vst [vmem:[%s440 + $0x130] sm:$0xff] %v2628
          %2693 = vst.msk [vmem:[%s440 + $0x138] sm:$0xff] %vm2522, %v2629
          %2694 = vst [vmem:[%s440 + $0x140] sm:$0xff] %v2630
          %2695 = vst.msk [vmem:[%s440 + $0x148] sm:$0xff] %vm2522, %v2631
          %2696 = vst [vmem:[%s440 + $0x150] sm:$0xff] %v2632
          %2697 = vst.msk [vmem:[%s440 + $0x158] sm:$0xff] %vm2522, %v2633
          %2698 = vst [vmem:[%s440 + $0x160] sm:$0xff] %v2634
          %2699 = vst.msk [vmem:[%s440 + $0x168] sm:$0xff] %vm2522, %v2635
          %2700 = vst [vmem:[%s440 + $0x170] sm:$0xff] %v2636
          %2701 = vst.msk [vmem:[%s440 + $0x178] sm:$0xff] %vm2522, %v2637
          %2702 = vst [vmem:[%s440 + $0x180] sm:$0xff] %v2638
          %2703 = vst.msk [vmem:[%s440 + $0x188] sm:$0xff] %vm2522, %v2639
          %2704 = vst [vmem:[%s440 + $0x190] sm:$0xff] %v2640
          %2705 = vst.msk [vmem:[%s440 + $0x198] sm:$0xff] %vm2522, %v2641
          %2706 = vst [vmem:[%s440 + $0x1a0] sm:$0xff] %v2642
          %2707 = vst.msk [vmem:[%s440 + $0x1a8] sm:$0xff] %vm2522, %v2643
          %2708 = vst [vmem:[%s440 + $0x1b0] sm:$0xff] %v2644
          %2709 = vst.msk [vmem:[%s440 + $0x1b8] sm:$0xff] %vm2522, %v2645
          %2710 = vst [vmem:[%s440 + $0x1c0] sm:$0xff] %v2646
          %2711 = vst.msk [vmem:[%s440 + $0x1c8] sm:$0xff] %vm2522, %v2647
          %2712 = vst [vmem:[%s440 + $0x1d0] sm:$0xff] %v2648
          %2713 = vst.msk [vmem:[%s440 + $0x1d8] sm:$0xff] %vm2522, %v2649
          %2714 = vst [vmem:[%s440 + $0x1e0] sm:$0xff] %v2650
          %2715 = vst.msk [vmem:[%s440 + $0x1e8] sm:$0xff] %vm2522, %v2651
          %2716 = vst [vmem:[%s440 + $0x1f0] sm:$0xff] %v2652
          %2717 = vst.msk [vmem:[%s440 + $0x1f8] sm:$0xff] %vm2522, %v2653
        $region62: #{tpu_custom_call.1} parent=49 // pred_fallthru
          _
        %s2718 = smul.u32 32, %s19
        %p2719 = scmp.lt.s32.totalorder %s18, 0
        %s2720 = scalar_select %p2719, %s18, 0
        %p2721 = scmp.lt.s32.totalorder %s2718, 31
        %s2722 = scalar_select %p2721, %s2718, 31
        %s2723 = smul.addr %s2722, 2
        %s2724 = smul.addr %s2720, 64
        %s2725 = sadd.s32 %s2723, %s2724
        %s2726 = smul.addr %s2725, 8
        %s2727 = scalar_lea.vmem %s2, %s2726
        // Predicated region
        $region63: #{tpu_custom_call.1} parent=49 // pred_check
          %p2728 = pneg %p108
        $region64: #{tpu_custom_call.1} parent=49 // pred_check_branch
          %2730 = sbr.rel (%p2728) target = $region66
        $region65: #{tpu_custom_call.1} parent=49 // pred_region
          %s2731 = smul.u32 32, %s19
        $region66: #{tpu_custom_call.1} parent=49 // pred_fallthru
          _
        // Predicated region
        $region67: #{tpu_custom_call.1} parent=49 // pred_check
          %p2732 = pneg %p108
        $region68: #{tpu_custom_call.1} parent=49 // pred_check_branch
          %2734 = sbr.rel (%p2732) target = $region70
        $region69: #{tpu_custom_call.1} parent=49 // pred_region
          %s2735 = smul.u32 32, %s19
          %p2736 = scmp.lt.s32.totalorder %s18, 0
          %s2737 = scalar_select %p2736, %s18, 0
          %p2738 = scmp.lt.s32.totalorder %s2735, 31
          %s2739 = scalar_select %p2738, %s2735, 31
          %s2740 = smul.addr %s2739, 2
          %s2741 = smul.addr %s2737, 64
          %s2742 = sadd.s32 %s2740, %s2741
          %s2743 = smul.addr %s2742, 8
          %s2744 = scalar_lea.vmem %s2, %s2743
        $region70: #{tpu_custom_call.1} parent=49 // pred_fallthru
          _
      $region50: #{tpu_custom_call.1} parent=5 // pred_fallthru
        _
      %p2745 = scmp.le.s32.totalorder 2, %s8
      // Predicated region
      $region71: #{tpu_custom_call.1} parent=5 // pred_check
        %p2746 = pneg %p2745
      $region72: #{tpu_custom_call.1} parent=5 // pred_check_branch
        %2748 = sbr.rel (%p2746) target = $region74
      $region73: #{tpu_custom_call.1} parent=5 // pred_region
        %s2749 = ssub.s32 %s8, 2
      $region74: #{tpu_custom_call.1} parent=5 // pred_fallthru
        _
    $region6: #{tpu_custom_call.1} parent=1 // loop_footer
      %s12 = sadd.s32 1, %s8
    $region7: #{tpu_custom_call.1} parent=1 // loop_footer_branch
      %7 = sbr.rel target = $region3
    $region8: #{tpu_custom_call.1} parent=1 // loop_exit
      _

</llo_original>
